<compile_context>
chip_gen: v5e
topology: v5e:2x2
jax: 0.10.0
libtpu: 0.0.40
codegen_flags: <defaults>
</compile_context>

<pallas_src>
from functools import partial

import jax
import jax.numpy as jnp
from jax.experimental import pallas as pl
from jax.experimental.pallas import tpu as pltpu


# ----------------------------------------------------------------------------
# Fused BasicBlock kernel: one grid step = B batch samples, all in VMEM.
# Activations live in a lane-dense (B*H, W*C) layout (channel = lane % C).
# ----------------------------------------------------------------------------
def _basic_block_kernel(x_ref, sh_ref, w1_ref, w2_ref, g_ref,
                        agg_ref, aggt_ref, aff_ref, o_ref, *, L, eps):
    x = x_ref[...]                        # (BH, KC)   B samples stacked on rows
    S_m1 = sh_ref[0]                      # (BH, BH)   y[h] = x[h-1]  (per sample)
    S_p1 = sh_ref[1]                      # (BH, BH)   y[h] = x[h+1]  (per sample)
    A = agg_ref[...]                      # (B, BH)    per-sample row aggregation
    At = aggt_ref[...]                    # (BH, B)    broadcast back per row
    G = g_ref[...]                        # (L, L)     per-group lane averaging (1/cnt)
    aff = aff_ref[...]                    # (8, L)     [s1,b1,s2,b2,sd,bd,0,0]

    def gn(y, s, b, relu):
        """GroupNorm (+optional ReLU); stats on MXU, one normalize pass."""
        cs = jnp.dot(A, y, preferred_element_type=jnp.float32)        # (B, L) sum
        cq = jnp.dot(A, y * y, preferred_element_type=jnp.float32)    # (B, L) sum sq
        mean = jnp.dot(cs, G, preferred_element_type=jnp.float32)     # (B, L)
        ey2 = jnp.dot(cq, G, preferred_element_type=jnp.float32)      # (B, L)
        var = jnp.maximum(ey2 - mean * mean, 0.0)
        inv = jax.lax.rsqrt(var + eps)                                 # (B, L)
        a = inv * s                                                    # (B, L)
        c = b - mean * a                                               # (B, L)
        af = jnp.dot(At, a, preferred_element_type=jnp.float32)       # (BH, L)
        cf = jnp.dot(At, c, preferred_element_type=jnp.float32)       # (BH, L)
        out = y * af + cf
        return jnp.maximum(out, 0.0) if relu else out

    # ---- conv1 (3x3) with the 1x1 downsample fused into the center matmul ----
    xm = jnp.dot(S_m1, x, preferred_element_type=jnp.float32)
    xp = jnp.dot(S_p1, x, preferred_element_type=jnp.float32)
    ctr = jnp.dot(x, w1_ref[:, L:3 * L], preferred_element_type=jnp.float32)  # (BH, 2L)
    h = (ctr[:, :L]
         + jnp.dot(xm, w1_ref[:, :L], preferred_element_type=jnp.float32)
         + jnp.dot(xp, w1_ref[:, 3 * L:], preferred_element_type=jnp.float32))
    idn = ctr[:, L:]                                                   # downsample branch

    h = gn(h, aff[0:1], aff[1:2], relu=True)

    # ---- conv2 (3x3) ----
    hm = jnp.dot(S_m1, h, preferred_element_type=jnp.float32)
    hp = jnp.dot(S_p1, h, preferred_element_type=jnp.float32)
    h2 = (jnp.dot(h, w2_ref[:, L:2 * L], preferred_element_type=jnp.float32)
          + jnp.dot(hm, w2_ref[:, :L], preferred_element_type=jnp.float32)
          + jnp.dot(hp, w2_ref[:, 2 * L:], preferred_element_type=jnp.float32))
    h2 = gn(h2, aff[2:3], aff[3:4], relu=False)

    # ---- downsample GN ----
    idn = gn(idn, aff[4:5], aff[5:6], relu=False)

    # ---- residual add + ReLU: single lane-dense (BH, L) = (128, 128) store ----
    o_ref[...] = jnp.maximum(h2 + idn, 0.0)


# ----------------------------------------------------------------------------
# One-time parameter re-layout (hoisted off the per-call launch path)
# ----------------------------------------------------------------------------
def _build_toeplitz(w_hwio, W):
    """(3,3,Cin,Cout) conv weight -> (3, W*Cin, W*Cout) per-row-offset matrices
    (column taps and W zero-padding folded in)."""
    mats = []
    for dy in range(3):
        m = sum(jnp.kron(jnp.eye(W, k=1 - dx, dtype=w_hwio.dtype), w_hwio[dy, dx])
                for dx in range(3))
        mats.append(m)
    return jnp.stack(mats)


def prepare_params(p, *, ngroups, H, W, B):
    """Build all constant kernel operands ONCE per parameter set."""
    Cin, planes = p["w1"].shape[2], p["w1"].shape[3]
    L = W * planes
    KC = W * Cin
    BH = B * H
    cg = planes // ngroups

    # conv weights: per-row-offset block-Toeplitz; downsample 1x1 -> block-diag.
    wt1 = _build_toeplitz(p["w1"], W)                              # (3, KC, L)
    wt2 = _build_toeplitz(p["w2"], W)                              # (3, L,  L)
    wdb = jnp.kron(jnp.eye(W, dtype=p["wd"].dtype), p["wd"])       # (KC, L)
    w1_all = jnp.concatenate([wt1[0], wt1[1], wdb, wt1[2]], axis=1)  # (KC, 4L)
    w2_all = jnp.concatenate([wt2[0], wt2[1], wt2[2]], axis=1)       # (L, 3L)

    # block-diagonal per-sample row-shift matrices (conv padding at sample edges).
    eye_b = jnp.eye(B, dtype=jnp.float32)
    s_m1 = jnp.kron(eye_b, jnp.eye(H, k=-1, dtype=jnp.float32))    # y[h] = x[h-1]
    s_p1 = jnp.kron(eye_b, jnp.eye(H, k=+1, dtype=jnp.float32))    # y[h] = x[h+1]
    shifts = jnp.stack([s_m1, s_p1])                               # (2, BH, BH)

    # per-sample row-aggregation matrix (and its transpose for broadcast-back).
    agg = jnp.kron(eye_b, jnp.ones((1, H), jnp.float32))           # (B, BH)
    agg_t = agg.T                                                  # (BH, B)

    # per-group lane-averaging matrix: lane l holds channel (l % planes).
    lane = jnp.arange(L)
    gid = (lane % planes) // cg
    same = (gid[:, None] == gid[None, :]).astype(jnp.float32)
    g_avg = same / float(H * W * cg)                               # (L, L)

    # GN affine params, one merged (8, L) slab (rows: s1,b1,s2,b2,sd,bd,pad,pad).
    tile = lambda v: jnp.tile(v, W).reshape(1, L)
    aff = jnp.concatenate(
        [tile(p["s1"]), tile(p["b1"]), tile(p["s2"]), tile(p["b2"]),
         tile(p["sd"]), tile(p["bd"]), jnp.zeros((2, L), jnp.float32)], axis=0)

    return dict(w1=w1_all, w2=w2_all, shifts=shifts, agg=agg, agg_t=agg_t,
                g_avg=g_avg, aff=aff)


# ----------------------------------------------------------------------------
# Forward wrapper: layout plumbing + one pallas_call
# ----------------------------------------------------------------------------
def basic_block_forward(x_nchw, prep, *, planes, B, eps=1e-5):
    N, Cin, H, W = x_nchw.shape
    assert N % B == 0, "batch must be a multiple of the per-step sample count B"
    L = W * planes
    KC = W * Cin
    BH = B * H

    # NCHW -> (N*H, W*Cin): lane-dense activations, B samples stacked per block.
    x2d = jnp.transpose(x_nchw, (0, 2, 3, 1)).reshape(N * H, KC)

    kernel = partial(_basic_block_kernel, L=L, eps=eps)
    out2d = pl.pallas_call(
        kernel,
        out_shape=jax.ShapeDtypeStruct((N * H, L), jnp.float32),
        grid=(N // B,),
        in_specs=[
            pl.BlockSpec((BH, KC), lambda n: (n, 0)),        # x (B samples)
            pl.BlockSpec((2, BH, BH), lambda n: (0, 0, 0)),  # row-shift matrices
            pl.BlockSpec((KC, 4 * L), lambda n: (0, 0)),     # conv1 (+downsample) weights
            pl.BlockSpec((L, 3 * L), lambda n: (0, 0)),      # conv2 weights
            pl.BlockSpec((L, L), lambda n: (0, 0)),          # per-group averaging
            pl.BlockSpec((B, BH), lambda n: (0, 0)),         # per-sample aggregation
            pl.BlockSpec((BH, B), lambda n: (0, 0)),         # aggregation transpose
            pl.BlockSpec((8, L), lambda n: (0, 0)),          # merged GN affine params
        ],
        out_specs=pl.BlockSpec((BH, L), lambda n: (n, 0)),
        compiler_params=pltpu.CompilerParams(dimension_semantics=("parallel",)),
    )(x2d, prep["shifts"], prep["w1"], prep["w2"], prep["g_avg"],
      prep["agg"], prep["agg_t"], prep["aff"])

    out = out2d.reshape(N, H, W, planes)
    return jnp.transpose(out, (0, 3, 1, 2))                  # NHWC -> NCHW


# ----------------------------------------------------------------------------
# Pure-JAX reference (for the correctness check)
# ----------------------------------------------------------------------------
def ref_forward(x_nchw, p, ngroups, eps=1e-5):
    x = jnp.transpose(x_nchw, (0, 2, 3, 1))

    def conv3x3_ref(h, w):
        return jax.lax.conv_general_dilated(
            h, w, window_strides=(1, 1), padding=((1, 1), (1, 1)),
            dimension_numbers=("NHWC", "HWIO", "NHWC"))

    def gn_ref(h, scale, bias, relu):
        N, H, W, C = h.shape
        cg = C // ngroups
        hg = h.reshape(N, H, W, ngroups, cg)
        mean = hg.mean(axis=(1, 2, 4), keepdims=True)
        var = ((hg - mean) ** 2).mean(axis=(1, 2, 4), keepdims=True)
        y = ((hg - mean) * jax.lax.rsqrt(var + eps)).reshape(N, H, W, C)
        y = y * scale + bias
        return jnp.maximum(y, 0.0) if relu else y

    h = conv3x3_ref(x, p["w1"])
    h = gn_ref(h, p["s1"], p["b1"], True)
    h = conv3x3_ref(h, p["w2"])
    h = gn_ref(h, p["s2"], p["b2"], False)

    idn = jnp.einsum("nhwc,cd->nhwd", x, p["wd"])
    idn = gn_ref(idn, p["sd"], p["bd"], False)

    out = jnp.maximum(h + idn, 0.0)
    return jnp.transpose(out, (0, 3, 1, 2))


# ----------------------------------------------------------------------------
if __name__ == "__main__":
    N, Cin, H, W = 16, 4, 16, 16
    planes, ngroups = 8, 2
    B = 8                      # samples per grid step -> M = B*H = 128, grid = 2

    key = jax.random.PRNGKey(0)
    ks = jax.random.split(key, 10)
    x = jax.random.normal(ks[0], (N, Cin, H, W), jnp.float32)

    params = {
        # conv3x3 weights stored as (3, 3, Cin, Cout)  (torch is (Cout, Cin, 3, 3))
        "w1": jax.random.normal(ks[1], (3, 3, Cin, planes), jnp.float32) * 0.1,
        "s1": 1.0 + 0.1 * jax.random.normal(ks[2], (planes,), jnp.float32),
        "b1": 0.1 * jax.random.normal(ks[3], (planes,), jnp.float32),
        "w2": jax.random.normal(ks[4], (3, 3, planes, planes), jnp.float32) * 0.1,
        "s2": 1.0 + 0.1 * jax.random.normal(ks[5], (planes,), jnp.float32),
        "b2": 0.1 * jax.random.normal(ks[6], (planes,), jnp.float32),
        # downsample: 1x1 conv as (Cin, Cout) matrix
        "wd": jax.random.normal(ks[7], (Cin, planes), jnp.float32) * 0.1,
        "sd": 1.0 + 0.1 * jax.random.normal(ks[8], (planes,), jnp.float32),
        "bd": 0.1 * jax.random.normal(ks[9], (planes,), jnp.float32),
    }

    # One-time weight re-layout (off the per-call launch path).
    prep = prepare_params(params, ngroups=ngroups, H=H, W=W, B=B)
    prep = jax.tree_util.tree_map(jax.block_until_ready, prep)

    fwd = jax.jit(partial(basic_block_forward, planes=planes, B=B))
    out = jax.block_until_ready(fwd(x, prep))

    ref = ref_forward(x, params, ngroups)
    assert out.shape == (N, planes, H, W), out.shape
    assert jnp.allclose(out, ref, atol=1e-3, rtol=1e-3), \
        float(jnp.max(jnp.abs(out - ref)))

    print("KERNEL_OK")
</pallas_src>

<mosaic_0001>
module attributes {stable_mosaic.version = 11 : i64} {
  func.func @_basic_block_kernel(%arg0: i32, %arg1: memref<128x64xf32, #tpu.memory_space<vmem>>, %arg2: memref<2x128x128xf32, #tpu.memory_space<vmem>>, %arg3: memref<64x512xf32, #tpu.memory_space<vmem>>, %arg4: memref<128x384xf32, #tpu.memory_space<vmem>>, %arg5: memref<128x128xf32, #tpu.memory_space<vmem>>, %arg6: memref<8x128xf32, #tpu.memory_space<vmem>>, %arg7: memref<128x8xf32, #tpu.memory_space<vmem>>, %arg8: memref<8x128xf32, #tpu.memory_space<vmem>>, %arg9: memref<128x128xf32, #tpu.memory_space<vmem>>) attributes {dimension_semantics = [#tpu.dimension_semantics<parallel>], iteration_bounds = array<i64: 2>, scalar_prefetch = 0 : i64, scratch_operands = 0 : i64, tpu.core_type = #tpu.core_type<tc>, window_params = [{transform_indices = @transform_0, window_bounds = array<i64: 128, 64>}, {pipeline_mode = #tpu.pipeline_mode<synchronous>, transform_indices = @transform_1, window_bounds = array<i64: 2, 128, 128>}, {pipeline_mode = #tpu.pipeline_mode<synchronous>, transform_indices = @transform_2, window_bounds = array<i64: 64, 512>}, {pipeline_mode = #tpu.pipeline_mode<synchronous>, transform_indices = @transform_3, window_bounds = array<i64: 128, 384>}, {pipeline_mode = #tpu.pipeline_mode<synchronous>, transform_indices = @transform_4, window_bounds = array<i64: 128, 128>}, {pipeline_mode = #tpu.pipeline_mode<synchronous>, transform_indices = @transform_5, window_bounds = array<i64: 8, 128>}, {pipeline_mode = #tpu.pipeline_mode<synchronous>, transform_indices = @transform_6, window_bounds = array<i64: 128, 8>}, {pipeline_mode = #tpu.pipeline_mode<synchronous>, transform_indices = @transform_7, window_bounds = array<i64: 8, 128>}, {transform_indices = @transform_8, window_bounds = array<i64: 128, 128>}]} {
    %c0 = arith.constant 0 : index
    %c0_0 = arith.constant 0 : index
    %0 = vector.load %arg1[%c0, %c0_0] : memref<128x64xf32, #tpu.memory_space<vmem>>, vector<128x64xf32>
    %c0_1 = arith.constant 0 : index
    %c0_2 = arith.constant 0 : index
    %c0_3 = arith.constant 0 : index
    %1 = vector.load %arg2[%c0_1, %c0_2, %c0_3] : memref<2x128x128xf32, #tpu.memory_space<vmem>>, vector<1x128x128xf32>
    %2 = vector.shape_cast %1 : vector<1x128x128xf32> to vector<128x128xf32>
    %c1 = arith.constant 1 : index
    %c0_4 = arith.constant 0 : index
    %c0_5 = arith.constant 0 : index
    %3 = vector.load %arg2[%c1, %c0_4, %c0_5] : memref<2x128x128xf32, #tpu.memory_space<vmem>>, vector<1x128x128xf32>
    %4 = vector.shape_cast %3 : vector<1x128x128xf32> to vector<128x128xf32>
    %c0_6 = arith.constant 0 : index
    %c0_7 = arith.constant 0 : index
    %5 = vector.load %arg6[%c0_6, %c0_7] : memref<8x128xf32, #tpu.memory_space<vmem>>, vector<8x128xf32>
    %c0_8 = arith.constant 0 : index
    %c0_9 = arith.constant 0 : index
    %6 = vector.load %arg7[%c0_8, %c0_9] : memref<128x8xf32, #tpu.memory_space<vmem>>, vector<128x8xf32>
    %c0_10 = arith.constant 0 : index
    %c0_11 = arith.constant 0 : index
    %7 = vector.load %arg5[%c0_10, %c0_11] : memref<128x128xf32, #tpu.memory_space<vmem>>, vector<128x128xf32>
    %c0_12 = arith.constant 0 : index
    %c0_13 = arith.constant 0 : index
    %8 = vector.load %arg8[%c0_12, %c0_13] : memref<8x128xf32, #tpu.memory_space<vmem>>, vector<8x128xf32>
    %cst = arith.constant dense<0.000000e+00> : vector<128x64xf32>
    %9 = tpu.matmul %2, %0, %cst {dimension_numbers = #tpu.dot_dimension_numbers<[1], [0], [0], [1], [0, 0, 1, 1], [], []>} : vector<128x128xf32>, vector<128x64xf32>, vector<128x64xf32> -> vector<128x64xf32>
    %cst_14 = arith.constant dense<0.000000e+00> : vector<128x64xf32>
    %10 = tpu.matmul %4, %0, %cst_14 {dimension_numbers = #tpu.dot_dimension_numbers<[1], [0], [0], [1], [0, 0, 1, 1], [], []>} : vector<128x128xf32>, vector<128x64xf32>, vector<128x64xf32> -> vector<128x64xf32>
    %c0_15 = arith.constant 0 : index
    %c128 = arith.constant 128 : index
    %11 = vector.load %arg3[%c0_15, %c128] : memref<64x512xf32, #tpu.memory_space<vmem>>, vector<64x256xf32>
    %cst_16 = arith.constant dense<0.000000e+00> : vector<128x256xf32>
    %12 = tpu.matmul %0, %11, %cst_16 {dimension_numbers = #tpu.dot_dimension_numbers<[1], [0], [0], [1], [0, 0, 1, 1], [], []>} : vector<128x64xf32>, vector<64x256xf32>, vector<128x256xf32> -> vector<128x256xf32>
    %13 = vector.extract_strided_slice %12 {offsets = [0, 0], sizes = [128, 128], strides = [1, 1]} : vector<128x256xf32> to vector<128x128xf32>
    %c0_17 = arith.constant 0 : index
    %c0_18 = arith.constant 0 : index
    %14 = vector.load %arg3[%c0_17, %c0_18] : memref<64x512xf32, #tpu.memory_space<vmem>>, vector<64x128xf32>
    %cst_19 = arith.constant dense<0.000000e+00> : vector<128x128xf32>
    %15 = tpu.matmul %9, %14, %cst_19 {dimension_numbers = #tpu.dot_dimension_numbers<[1], [0], [0], [1], [0, 0, 1, 1], [], []>} : vector<128x64xf32>, vector<64x128xf32>, vector<128x128xf32> -> vector<128x128xf32>
    %16 = arith.addf %13, %15 : vector<128x128xf32>
    %c0_20 = arith.constant 0 : index
    %c384 = arith.constant 384 : index
    %17 = vector.load %arg3[%c0_20, %c384] : memref<64x512xf32, #tpu.memory_space<vmem>>, vector<64x128xf32>
    %cst_21 = arith.constant dense<0.000000e+00> : vector<128x128xf32>
    %18 = tpu.matmul %10, %17, %cst_21 {dimension_numbers = #tpu.dot_dimension_numbers<[1], [0], [0], [1], [0, 0, 1, 1], [], []>} : vector<128x64xf32>, vector<64x128xf32>, vector<128x128xf32> -> vector<128x128xf32>
    %19 = arith.addf %16, %18 : vector<128x128xf32>
    %20 = vector.extract_strided_slice %12 {offsets = [0, 128], sizes = [128, 128], strides = [1, 1]} : vector<128x256xf32> to vector<128x128xf32>
    %21 = vector.extract_strided_slice %8 {offsets = [0, 0], sizes = [1, 128], strides = [1, 1]} : vector<8x128xf32> to vector<1x128xf32>
    %22 = vector.extract_strided_slice %8 {offsets = [1, 0], sizes = [1, 128], strides = [1, 1]} : vector<8x128xf32> to vector<1x128xf32>
    %cst_22 = arith.constant dense<0.000000e+00> : vector<8x128xf32>
    %23 = tpu.matmul %5, %19, %cst_22 {dimension_numbers = #tpu.dot_dimension_numbers<[1], [0], [0], [1], [0, 0, 1, 1], [], []>} : vector<8x128xf32>, vector<128x128xf32>, vector<8x128xf32> -> vector<8x128xf32>
    %24 = arith.mulf %19, %19 : vector<128x128xf32>
    %cst_23 = arith.constant dense<0.000000e+00> : vector<8x128xf32>
    %25 = tpu.matmul %5, %24, %cst_23 {dimension_numbers = #tpu.dot_dimension_numbers<[1], [0], [0], [1], [0, 0, 1, 1], [], []>} : vector<8x128xf32>, vector<128x128xf32>, vector<8x128xf32> -> vector<8x128xf32>
    %cst_24 = arith.constant dense<0.000000e+00> : vector<8x128xf32>
    %26 = tpu.matmul %23, %7, %cst_24 {dimension_numbers = #tpu.dot_dimension_numbers<[1], [0], [0], [1], [0, 0, 1, 1], [], []>} : vector<8x128xf32>, vector<128x128xf32>, vector<8x128xf32> -> vector<8x128xf32>
    %cst_25 = arith.constant dense<0.000000e+00> : vector<8x128xf32>
    %27 = tpu.matmul %25, %7, %cst_25 {dimension_numbers = #tpu.dot_dimension_numbers<[1], [0], [0], [1], [0, 0, 1, 1], [], []>} : vector<8x128xf32>, vector<128x128xf32>, vector<8x128xf32> -> vector<8x128xf32>
    %28 = arith.mulf %26, %26 : vector<8x128xf32>
    %29 = arith.subf %27, %28 : vector<8x128xf32>
    %cst_26 = arith.constant 0.000000e+00 : f32
    %30 = vector.broadcast %cst_26 : f32 to vector<8x128xf32>
    %31 = arith.maximumf %29, %30 : vector<8x128xf32>
    %cst_27 = arith.constant 9.99999974E-6 : f32
    %32 = vector.broadcast %cst_27 : f32 to vector<8x128xf32>
    %33 = arith.addf %31, %32 : vector<8x128xf32>
    %34 = math.rsqrt %33 : vector<8x128xf32>
    %35 = vector.broadcast %21 : vector<1x128xf32> to vector<8x128xf32>
    %36 = arith.mulf %34, %35 : vector<8x128xf32>
    %37 = arith.mulf %26, %36 : vector<8x128xf32>
    %38 = vector.broadcast %22 : vector<1x128xf32> to vector<8x128xf32>
    %39 = arith.subf %38, %37 : vector<8x128xf32>
    %cst_28 = arith.constant dense<0.000000e+00> : vector<128x128xf32>
    %40 = tpu.matmul %6, %36, %cst_28 {dimension_numbers = #tpu.dot_dimension_numbers<[1], [0], [0], [1], [0, 0, 1, 1], [], []>} : vector<128x8xf32>, vector<8x128xf32>, vector<128x128xf32> -> vector<128x128xf32>
    %cst_29 = arith.constant dense<0.000000e+00> : vector<128x128xf32>
    %41 = tpu.matmul %6, %39, %cst_29 {dimension_numbers = #tpu.dot_dimension_numbers<[1], [0], [0], [1], [0, 0, 1, 1], [], []>} : vector<128x8xf32>, vector<8x128xf32>, vector<128x128xf32> -> vector<128x128xf32>
    %42 = arith.mulf %19, %40 : vector<128x128xf32>
    %43 = arith.addf %42, %41 : vector<128x128xf32>
    %cst_30 = arith.constant 0.000000e+00 : f32
    %44 = vector.broadcast %cst_30 : f32 to vector<128x128xf32>
    %45 = arith.maximumf %43, %44 : vector<128x128xf32>
    %cst_31 = arith.constant dense<0.000000e+00> : vector<128x128xf32>
    %46 = tpu.matmul %2, %45, %cst_31 {dimension_numbers = #tpu.dot_dimension_numbers<[1], [0], [0], [1], [0, 0, 1, 1], [], []>} : vector<128x128xf32>, vector<128x128xf32>, vector<128x128xf32> -> vector<128x128xf32>
    %cst_32 = arith.constant dense<0.000000e+00> : vector<128x128xf32>
    %47 = tpu.matmul %4, %45, %cst_32 {dimension_numbers = #tpu.dot_dimension_numbers<[1], [0], [0], [1], [0, 0, 1, 1], [], []>} : vector<128x128xf32>, vector<128x128xf32>, vector<128x128xf32> -> vector<128x128xf32>
    %c0_33 = arith.constant 0 : index
    %c128_34 = arith.constant 128 : index
    %48 = vector.load %arg4[%c0_33, %c128_34] : memref<128x384xf32, #tpu.memory_space<vmem>>, vector<128x128xf32>
    %cst_35 = arith.constant dense<0.000000e+00> : vector<128x128xf32>
    %49 = tpu.matmul %45, %48, %cst_35 {dimension_numbers = #tpu.dot_dimension_numbers<[1], [0], [0], [1], [0, 0, 1, 1], [], []>} : vector<128x128xf32>, vector<128x128xf32>, vector<128x128xf32> -> vector<128x128xf32>
    %c0_36 = arith.constant 0 : index
    %c0_37 = arith.constant 0 : index
    %50 = vector.load %arg4[%c0_36, %c0_37] : memref<128x384xf32, #tpu.memory_space<vmem>>, vector<128x128xf32>
    %cst_38 = arith.constant dense<0.000000e+00> : vector<128x128xf32>
    %51 = tpu.matmul %46, %50, %cst_38 {dimension_numbers = #tpu.dot_dimension_numbers<[1], [0], [0], [1], [0, 0, 1, 1], [], []>} : vector<128x128xf32>, vector<128x128xf32>, vector<128x128xf32> -> vector<128x128xf32>
    %52 = arith.addf %49, %51 : vector<128x128xf32>
    %c0_39 = arith.constant 0 : index
    %c256 = arith.constant 256 : index
    %53 = vector.load %arg4[%c0_39, %c256] : memref<128x384xf32, #tpu.memory_space<vmem>>, vector<128x128xf32>
    %cst_40 = arith.constant dense<0.000000e+00> : vector<128x128xf32>
    %54 = tpu.matmul %47, %53, %cst_40 {dimension_numbers = #tpu.dot_dimension_numbers<[1], [0], [0], [1], [0, 0, 1, 1], [], []>} : vector<128x128xf32>, vector<128x128xf32>, vector<128x128xf32> -> vector<128x128xf32>
    %55 = arith.addf %52, %54 : vector<128x128xf32>
    %56 = vector.extract_strided_slice %8 {offsets = [2, 0], sizes = [1, 128], strides = [1, 1]} : vector<8x128xf32> to vector<1x128xf32>
    %57 = vector.extract_strided_slice %8 {offsets = [3, 0], sizes = [1, 128], strides = [1, 1]} : vector<8x128xf32> to vector<1x128xf32>
    %cst_41 = arith.constant dense<0.000000e+00> : vector<8x128xf32>
    %58 = tpu.matmul %5, %55, %cst_41 {dimension_numbers = #tpu.dot_dimension_numbers<[1], [0], [0], [1], [0, 0, 1, 1], [], []>} : vector<8x128xf32>, vector<128x128xf32>, vector<8x128xf32> -> vector<8x128xf32>
    %59 = arith.mulf %55, %55 : vector<128x128xf32>
    %cst_42 = arith.constant dense<0.000000e+00> : vector<8x128xf32>
    %60 = tpu.matmul %5, %59, %cst_42 {dimension_numbers = #tpu.dot_dimension_numbers<[1], [0], [0], [1], [0, 0, 1, 1], [], []>} : vector<8x128xf32>, vector<128x128xf32>, vector<8x128xf32> -> vector<8x128xf32>
    %cst_43 = arith.constant dense<0.000000e+00> : vector<8x128xf32>
    %61 = tpu.matmul %58, %7, %cst_43 {dimension_numbers = #tpu.dot_dimension_numbers<[1], [0], [0], [1], [0, 0, 1, 1], [], []>} : vector<8x128xf32>, vector<128x128xf32>, vector<8x128xf32> -> vector<8x128xf32>
    %cst_44 = arith.constant dense<0.000000e+00> : vector<8x128xf32>
    %62 = tpu.matmul %60, %7, %cst_44 {dimension_numbers = #tpu.dot_dimension_numbers<[1], [0], [0], [1], [0, 0, 1, 1], [], []>} : vector<8x128xf32>, vector<128x128xf32>, vector<8x128xf32> -> vector<8x128xf32>
    %63 = arith.mulf %61, %61 : vector<8x128xf32>
    %64 = arith.subf %62, %63 : vector<8x128xf32>
    %cst_45 = arith.constant 0.000000e+00 : f32
    %65 = vector.broadcast %cst_45 : f32 to vector<8x128xf32>
    %66 = arith.maximumf %64, %65 : vector<8x128xf32>
    %cst_46 = arith.constant 9.99999974E-6 : f32
    %67 = vector.broadcast %cst_46 : f32 to vector<8x128xf32>
    %68 = arith.addf %66, %67 : vector<8x128xf32>
    %69 = math.rsqrt %68 : vector<8x128xf32>
    %70 = vector.broadcast %56 : vector<1x128xf32> to vector<8x128xf32>
    %71 = arith.mulf %69, %70 : vector<8x128xf32>
    %72 = arith.mulf %61, %71 : vector<8x128xf32>
    %73 = vector.broadcast %57 : vector<1x128xf32> to vector<8x128xf32>
    %74 = arith.subf %73, %72 : vector<8x128xf32>
    %cst_47 = arith.constant dense<0.000000e+00> : vector<128x128xf32>
    %75 = tpu.matmul %6, %71, %cst_47 {dimension_numbers = #tpu.dot_dimension_numbers<[1], [0], [0], [1], [0, 0, 1, 1], [], []>} : vector<128x8xf32>, vector<8x128xf32>, vector<128x128xf32> -> vector<128x128xf32>
    %cst_48 = arith.constant dense<0.000000e+00> : vector<128x128xf32>
    %76 = tpu.matmul %6, %74, %cst_48 {dimension_numbers = #tpu.dot_dimension_numbers<[1], [0], [0], [1], [0, 0, 1, 1], [], []>} : vector<128x8xf32>, vector<8x128xf32>, vector<128x128xf32> -> vector<128x128xf32>
    %77 = arith.mulf %55, %75 : vector<128x128xf32>
    %78 = arith.addf %77, %76 : vector<128x128xf32>
    %79 = vector.extract_strided_slice %8 {offsets = [4, 0], sizes = [1, 128], strides = [1, 1]} : vector<8x128xf32> to vector<1x128xf32>
    %80 = vector.extract_strided_slice %8 {offsets = [5, 0], sizes = [1, 128], strides = [1, 1]} : vector<8x128xf32> to vector<1x128xf32>
    %cst_49 = arith.constant dense<0.000000e+00> : vector<8x128xf32>
    %81 = tpu.matmul %5, %20, %cst_49 {dimension_numbers = #tpu.dot_dimension_numbers<[1], [0], [0], [1], [0, 0, 1, 1], [], []>} : vector<8x128xf32>, vector<128x128xf32>, vector<8x128xf32> -> vector<8x128xf32>
    %82 = arith.mulf %20, %20 : vector<128x128xf32>
    %cst_50 = arith.constant dense<0.000000e+00> : vector<8x128xf32>
    %83 = tpu.matmul %5, %82, %cst_50 {dimension_numbers = #tpu.dot_dimension_numbers<[1], [0], [0], [1], [0, 0, 1, 1], [], []>} : vector<8x128xf32>, vector<128x128xf32>, vector<8x128xf32> -> vector<8x128xf32>
    %cst_51 = arith.constant dense<0.000000e+00> : vector<8x128xf32>
    %84 = tpu.matmul %81, %7, %cst_51 {dimension_numbers = #tpu.dot_dimension_numbers<[1], [0], [0], [1], [0, 0, 1, 1], [], []>} : vector<8x128xf32>, vector<128x128xf32>, vector<8x128xf32> -> vector<8x128xf32>
    %cst_52 = arith.constant dense<0.000000e+00> : vector<8x128xf32>
    %85 = tpu.matmul %83, %7, %cst_52 {dimension_numbers = #tpu.dot_dimension_numbers<[1], [0], [0], [1], [0, 0, 1, 1], [], []>} : vector<8x128xf32>, vector<128x128xf32>, vector<8x128xf32> -> vector<8x128xf32>
    %86 = arith.mulf %84, %84 : vector<8x128xf32>
    %87 = arith.subf %85, %86 : vector<8x128xf32>
    %cst_53 = arith.constant 0.000000e+00 : f32
    %88 = vector.broadcast %cst_53 : f32 to vector<8x128xf32>
    %89 = arith.maximumf %87, %88 : vector<8x128xf32>
    %cst_54 = arith.constant 9.99999974E-6 : f32
    %90 = vector.broadcast %cst_54 : f32 to vector<8x128xf32>
    %91 = arith.addf %89, %90 : vector<8x128xf32>
    %92 = math.rsqrt %91 : vector<8x128xf32>
    %93 = vector.broadcast %79 : vector<1x128xf32> to vector<8x128xf32>
    %94 = arith.mulf %92, %93 : vector<8x128xf32>
    %95 = arith.mulf %84, %94 : vector<8x128xf32>
    %96 = vector.broadcast %80 : vector<1x128xf32> to vector<8x128xf32>
    %97 = arith.subf %96, %95 : vector<8x128xf32>
    %cst_55 = arith.constant dense<0.000000e+00> : vector<128x128xf32>
    %98 = tpu.matmul %6, %94, %cst_55 {dimension_numbers = #tpu.dot_dimension_numbers<[1], [0], [0], [1], [0, 0, 1, 1], [], []>} : vector<128x8xf32>, vector<8x128xf32>, vector<128x128xf32> -> vector<128x128xf32>
    %cst_56 = arith.constant dense<0.000000e+00> : vector<128x128xf32>
    %99 = tpu.matmul %6, %97, %cst_56 {dimension_numbers = #tpu.dot_dimension_numbers<[1], [0], [0], [1], [0, 0, 1, 1], [], []>} : vector<128x8xf32>, vector<8x128xf32>, vector<128x128xf32> -> vector<128x128xf32>
    %100 = arith.mulf %20, %98 : vector<128x128xf32>
    %101 = arith.addf %100, %99 : vector<128x128xf32>
    %102 = arith.addf %78, %101 : vector<128x128xf32>
    %cst_57 = arith.constant 0.000000e+00 : f32
    %103 = vector.broadcast %cst_57 : f32 to vector<128x128xf32>
    %104 = arith.maximumf %102, %103 : vector<128x128xf32>
    %c0_58 = arith.constant 0 : index
    %c0_59 = arith.constant 0 : index
    %105 = vector.load %arg9[%c0_58, %c0_59] : memref<128x128xf32, #tpu.memory_space<vmem>>, vector<128x128xf32>
    tpu.vector_store %arg9[%c0_58, %c0_59], %104 {strides = array<i32>} : memref<128x128xf32, #tpu.memory_space<vmem>>, vector<128x128xf32>,
    return
  }
  func.func @transform_0(%arg0: i32) -> (i32, i32) {
    %c0_i32 = arith.constant 0 : i32
    %c0_i32_0 = arith.constant 0 : i32
    return %arg0, %c0_i32 : i32, i32
  }
  func.func @transform_1(%arg0: i32) -> (i32, i32, i32) {
    %c0_i32 = arith.constant 0 : i32
    %c0_i32_0 = arith.constant 0 : i32
    %c0_i32_1 = arith.constant 0 : i32
    %c0_i32_2 = arith.constant 0 : i32
    return %c0_i32, %c0_i32_0, %c0_i32_1 : i32, i32, i32
  }
  func.func @transform_2(%arg0: i32) -> (i32, i32) {
    %c0_i32 = arith.constant 0 : i32
    %c0_i32_0 = arith.constant 0 : i32
    %c0_i32_1 = arith.constant 0 : i32
    return %c0_i32, %c0_i32_0 : i32, i32
  }
  func.func @transform_3(%arg0: i32) -> (i32, i32) {
    %c0_i32 = arith.constant 0 : i32
    %c0_i32_0 = arith.constant 0 : i32
    %c0_i32_1 = arith.constant 0 : i32
    return %c0_i32, %c0_i32_0 : i32, i32
  }
  func.func @transform_4(%arg0: i32) -> (i32, i32) {
    %c0_i32 = arith.constant 0 : i32
    %c0_i32_0 = arith.constant 0 : i32
    %c0_i32_1 = arith.constant 0 : i32
    return %c0_i32, %c0_i32_0 : i32, i32
  }
  func.func @transform_5(%arg0: i32) -> (i32, i32) {
    %c0_i32 = arith.constant 0 : i32
    %c0_i32_0 = arith.constant 0 : i32
    %c0_i32_1 = arith.constant 0 : i32
    return %c0_i32, %c0_i32_0 : i32, i32
  }
  func.func @transform_6(%arg0: i32) -> (i32, i32) {
    %c0_i32 = arith.constant 0 : i32
    %c0_i32_0 = arith.constant 0 : i32
    %c0_i32_1 = arith.constant 0 : i32
    return %c0_i32, %c0_i32_0 : i32, i32
  }
  func.func @transform_7(%arg0: i32) -> (i32, i32) {
    %c0_i32 = arith.constant 0 : i32
    %c0_i32_0 = arith.constant 0 : i32
    %c0_i32_1 = arith.constant 0 : i32
    return %c0_i32, %c0_i32_0 : i32, i32
  }
  func.func @transform_8(%arg0: i32) -> (i32, i32) {
    %c0_i32 = arith.constant 0 : i32
    %c0_i32_0 = arith.constant 0 : i32
    return %arg0, %c0_i32 : i32, i32
  }
}

</mosaic_0001>

<llo_original>
// kernel: basic_block_forward.1
$region0: #{basic_block_forward.1}
  #allocation0 [shape = 'u32[]', space=smem, size = 0x4, offset = 0x4, fixed_abs, tag = 'smem constant byte address 0x4 - core index']
  #allocation1 [shape = 'u32[72,128]{1,0:T(1,128)}', space=vmem, size = 0x9000, scoped, tag = 'internal scratch']
  %s0 = inlined_call_operand.vmem [shape: f32[256,64], index: 0, kind: input, shape index: {}]
  %s1 = inlined_call_operand.vmem [shape: f32[2,128,128], index: 1, kind: input, shape index: {}]
  %s2 = inlined_call_operand.vmem [shape: f32[64,512], index: 2, kind: input, shape index: {}]
  %s3 = inlined_call_operand.vmem [shape: f32[128,384], index: 3, kind: input, shape index: {}]
  %s4 = inlined_call_operand.vmem [shape: f32[128,128], index: 4, kind: input, shape index: {}]
  %s5 = inlined_call_operand.vmem [shape: f32[8,128], index: 5, kind: input, shape index: {}]
  %s6 = inlined_call_operand.vmem [shape: f32[128,8], index: 6, kind: input, shape index: {}]
  %s7 = inlined_call_operand.vmem [shape: f32[8,128], index: 7, kind: input, shape index: {}]
  %s8 = inlined_call_operand.vmem [shape: f32[256,128], index: 8, kind: output, shape index: {}]
  %s9 = sld [smem:[#allocation0]]
  $region65: #{basic_block_forward.1} parent=0
    _
  %s11 = ssub.s32 1, %s9
  %s12 = scalar_select 0, %s11, %s9
  loop: start=0, step=1, limit=4
  $region2: #{basic_block_forward.1} parent=0 // loop_pre_header
    _
  $region3: #{basic_block_forward.1} parent=0 // loop_header
    %s14 = sphi 0, %s18
    %p15 = scmp.ge.s32.totalorder %s14, 4
    %s24 = sphi 0, %s26
    %s27 = sphi 0, %s24
    %s28 = sphi 0, %s27
    %s44 = sphi 0, %s28
    %s48 = sphi 0, %s48
    %s50 = sphi 0, %s48
    %s51 = sphi 0, %s50
    %s65 = sphi 0, %s51
    %s69 = sphi 0, %s69
    %s71 = sphi 0, %s69
    %s72 = sphi 0, %s71
    %s86 = sphi 0, %s72
    %s90 = sphi 0, %s90
    %s92 = sphi 0, %s90
    %s93 = sphi 0, %s92
    %s107 = sphi 0, %s93
    %s111 = sphi 0, %s111
    %s113 = sphi 0, %s111
    %s114 = sphi 0, %s113
    %s128 = sphi 0, %s114
    %s132 = sphi 0, %s132
    %s134 = sphi 0, %s132
    %s135 = sphi 0, %s134
    %s149 = sphi 0, %s135
    %s153 = sphi 0, %s153
    %s155 = sphi 0, %s153
    %s156 = sphi 0, %s155
    %s170 = sphi 0, %s156
    %s174 = sphi 0, %s174
    %s176 = sphi 0, %s174
    %s177 = sphi 0, %s176
    %s191 = sphi 0, %s177
    %s197 = sphi 0, %s199
    %s200 = sphi 0, %s197
    %s201 = sphi 0, %s200
    %s217 = sphi 0, %s201
  $region4: #{basic_block_forward.1} parent=0 // loop_header_branch
    %17 = sbr.rel (%p15) target = $region8
  $region5: #{basic_block_forward.1} parent=0 // loop_body
    %s19 = ssub.s32 %s14, 1
    %s20 = ssub.s32 %s14, 2
    %s21 = sadd.s32 %s14, 1
    %s22 = ssub.s32 %s14, %s21
    %p23 = scmp.eq.s32.totalorder %s22, 0
    %s25 = sadd.s32 %s24, 1
    %s26 = scalar_select %p23, %s24, %s25
    %p29 = pneg %p23
    %p30 = scmp.eq.s32.totalorder %s14, 1
    %p31 = por %p29, %p30
    %p32 = scmp.ne.s32.totalorder %s24, %s27
    %p33 = scmp.eq.s32.totalorder %s14, 0
    %p34 = por %p32, %p33
    %p35 = scmp.ne.s32.totalorder %s24, %s27
    %p36 = scmp.eq.s32.totalorder %s19, 1
    %p37 = por %p35, %p36
    %p38 = scmp.ne.s32.totalorder %s27, %s28
    %p39 = scmp.eq.s32.totalorder %s19, 0
    %p40 = por %p38, %p39
    %p41 = scmp.ne.s32.totalorder %s27, %s28
    %p42 = scmp.eq.s32.totalorder %s20, 1
    %p43 = por %p41, %p42
    %p45 = scmp.ne.s32.totalorder %s28, %s44
    %p46 = scmp.eq.s32.totalorder %s20, 0
    %p47 = por %p45, %p46
    %s49 = sadd.s32 %s48, 1
    %p52 = scmp.eq.s32.totalorder %s14, 1
    %p53 = scmp.ne.s32.totalorder %s48, %s50
    %p54 = scmp.eq.s32.totalorder %s14, 0
    %p55 = por %p53, %p54
    %p56 = scmp.ne.s32.totalorder %s48, %s50
    %p57 = scmp.eq.s32.totalorder %s19, 1
    %p58 = por %p56, %p57
    %p59 = scmp.ne.s32.totalorder %s50, %s51
    %p60 = scmp.eq.s32.totalorder %s19, 0
    %p61 = por %p59, %p60
    %p62 = scmp.ne.s32.totalorder %s50, %s51
    %p63 = scmp.eq.s32.totalorder %s20, 1
    %p64 = por %p62, %p63
    %p66 = scmp.ne.s32.totalorder %s51, %s65
    %p67 = scmp.eq.s32.totalorder %s20, 0
    %p68 = por %p66, %p67
    %s70 = sadd.s32 %s69, 1
    %p73 = scmp.eq.s32.totalorder %s14, 1
    %p74 = scmp.ne.s32.totalorder %s69, %s71
    %p75 = scmp.eq.s32.totalorder %s14, 0
    %p76 = por %p74, %p75
    %p77 = scmp.ne.s32.totalorder %s69, %s71
    %p78 = scmp.eq.s32.totalorder %s19, 1
    %p79 = por %p77, %p78
    %p80 = scmp.ne.s32.totalorder %s71, %s72
    %p81 = scmp.eq.s32.totalorder %s19, 0
    %p82 = por %p80, %p81
    %p83 = scmp.ne.s32.totalorder %s71, %s72
    %p84 = scmp.eq.s32.totalorder %s20, 1
    %p85 = por %p83, %p84
    %p87 = scmp.ne.s32.totalorder %s72, %s86
    %p88 = scmp.eq.s32.totalorder %s20, 0
    %p89 = por %p87, %p88
    %s91 = sadd.s32 %s90, 1
    %p94 = scmp.eq.s32.totalorder %s14, 1
    %p95 = scmp.ne.s32.totalorder %s90, %s92
    %p96 = scmp.eq.s32.totalorder %s14, 0
    %p97 = por %p95, %p96
    %p98 = scmp.ne.s32.totalorder %s90, %s92
    %p99 = scmp.eq.s32.totalorder %s19, 1
    %p100 = por %p98, %p99
    %p101 = scmp.ne.s32.totalorder %s92, %s93
    %p102 = scmp.eq.s32.totalorder %s19, 0
    %p103 = por %p101, %p102
    %p104 = scmp.ne.s32.totalorder %s92, %s93
    %p105 = scmp.eq.s32.totalorder %s20, 1
    %p106 = por %p104, %p105
    %p108 = scmp.ne.s32.totalorder %s93, %s107
    %p109 = scmp.eq.s32.totalorder %s20, 0
    %p110 = por %p108, %p109
    %s112 = sadd.s32 %s111, 1
    %p115 = scmp.eq.s32.totalorder %s14, 1
    %p116 = scmp.ne.s32.totalorder %s111, %s113
    %p117 = scmp.eq.s32.totalorder %s14, 0
    %p118 = por %p116, %p117
    %p119 = scmp.ne.s32.totalorder %s111, %s113
    %p120 = scmp.eq.s32.totalorder %s19, 1
    %p121 = por %p119, %p120
    %p122 = scmp.ne.s32.totalorder %s113, %s114
    %p123 = scmp.eq.s32.totalorder %s19, 0
    %p124 = por %p122, %p123
    %p125 = scmp.ne.s32.totalorder %s113, %s114
    %p126 = scmp.eq.s32.totalorder %s20, 1
    %p127 = por %p125, %p126
    %p129 = scmp.ne.s32.totalorder %s114, %s128
    %p130 = scmp.eq.s32.totalorder %s20, 0
    %p131 = por %p129, %p130
    %s133 = sadd.s32 %s132, 1
    %p136 = scmp.eq.s32.totalorder %s14, 1
    %p137 = scmp.ne.s32.totalorder %s132, %s134
    %p138 = scmp.eq.s32.totalorder %s14, 0
    %p139 = por %p137, %p138
    %p140 = scmp.ne.s32.totalorder %s132, %s134
    %p141 = scmp.eq.s32.totalorder %s19, 1
    %p142 = por %p140, %p141
    %p143 = scmp.ne.s32.totalorder %s134, %s135
    %p144 = scmp.eq.s32.totalorder %s19, 0
    %p145 = por %p143, %p144
    %p146 = scmp.ne.s32.totalorder %s134, %s135
    %p147 = scmp.eq.s32.totalorder %s20, 1
    %p148 = por %p146, %p147
    %p150 = scmp.ne.s32.totalorder %s135, %s149
    %p151 = scmp.eq.s32.totalorder %s20, 0
    %p152 = por %p150, %p151
    %s154 = sadd.s32 %s153, 1
    %p157 = scmp.eq.s32.totalorder %s14, 1
    %p158 = scmp.ne.s32.totalorder %s153, %s155
    %p159 = scmp.eq.s32.totalorder %s14, 0
    %p160 = por %p158, %p159
    %p161 = scmp.ne.s32.totalorder %s153, %s155
    %p162 = scmp.eq.s32.totalorder %s19, 1
    %p163 = por %p161, %p162
    %p164 = scmp.ne.s32.totalorder %s155, %s156
    %p165 = scmp.eq.s32.totalorder %s19, 0
    %p166 = por %p164, %p165
    %p167 = scmp.ne.s32.totalorder %s155, %s156
    %p168 = scmp.eq.s32.totalorder %s20, 1
    %p169 = por %p167, %p168
    %p171 = scmp.ne.s32.totalorder %s156, %s170
    %p172 = scmp.eq.s32.totalorder %s20, 0
    %p173 = por %p171, %p172
    %s175 = sadd.s32 %s174, 1
    %p178 = scmp.eq.s32.totalorder %s14, 1
    %p179 = scmp.ne.s32.totalorder %s174, %s176
    %p180 = scmp.eq.s32.totalorder %s14, 0
    %p181 = por %p179, %p180
    %p182 = scmp.ne.s32.totalorder %s174, %s176
    %p183 = scmp.eq.s32.totalorder %s19, 1
    %p184 = por %p182, %p183
    %p185 = scmp.ne.s32.totalorder %s176, %s177
    %p186 = scmp.eq.s32.totalorder %s19, 0
    %p187 = por %p185, %p186
    %p188 = scmp.ne.s32.totalorder %s176, %s177
    %p189 = scmp.eq.s32.totalorder %s20, 1
    %p190 = por %p188, %p189
    %p192 = scmp.ne.s32.totalorder %s177, %s191
    %p193 = scmp.eq.s32.totalorder %s20, 0
    %p194 = por %p192, %p193
    %s195 = ssub.s32 %s14, %s21
    %p196 = scmp.eq.s32.totalorder %s195, 0
    %s198 = sadd.s32 %s197, 1
    %s199 = scalar_select %p196, %s197, %s198
    %p202 = pneg %p196
    %p203 = scmp.eq.s32.totalorder %s14, 1
    %p204 = por %p202, %p203
    %p205 = scmp.ne.s32.totalorder %s197, %s200
    %p206 = scmp.eq.s32.totalorder %s14, 0
    %p207 = por %p205, %p206
    %p208 = scmp.ne.s32.totalorder %s197, %s200
    %p209 = scmp.eq.s32.totalorder %s19, 1
    %p210 = por %p208, %p209
    %p211 = scmp.ne.s32.totalorder %s200, %s201
    %p212 = scmp.eq.s32.totalorder %s19, 0
    %p213 = por %p211, %p212
    %p214 = scmp.ne.s32.totalorder %s200, %s201
    %p215 = scmp.eq.s32.totalorder %s20, 1
    %p216 = por %p214, %p215
    %p218 = scmp.ne.s32.totalorder %s201, %s217
    %p219 = scmp.eq.s32.totalorder %s20, 0
    %p220 = por %p218, %p219
    %p221 = scmp.le.s32.totalorder 1, %s14
    %p222 = scmp.lt.s32.totalorder %s14, 3
    %p223 = pnand %p221, %p222
    %p224 = pneg %p223
    // Predicated region
    $region9: #{basic_block_forward.1} parent=5 // pred_check
      _
    $region10: #{basic_block_forward.1} parent=5 // pred_check_branch
      %226 = sbr.rel (%p223) target = $region12
    $region11: #{basic_block_forward.1} parent=5 // pred_region
      %s227 = ssub.s32 %s14, 1
      // Predicated region
      $region13: #{basic_block_forward.1} parent=11 // pred_check
        %p228 = pneg %p61
      $region14: #{basic_block_forward.1} parent=11 // pred_check_branch
        %230 = sbr.rel (%p228) target = $region16
      $region15: #{basic_block_forward.1} parent=11 // pred_region
        _
      $region16: #{basic_block_forward.1} parent=11 // pred_fallthru
        _
      // Predicated region
      $region17: #{basic_block_forward.1} parent=11 // pred_check
        %p231 = pneg %p82
      $region18: #{basic_block_forward.1} parent=11 // pred_check_branch
        %233 = sbr.rel (%p231) target = $region20
      $region19: #{basic_block_forward.1} parent=11 // pred_region
        _
      $region20: #{basic_block_forward.1} parent=11 // pred_fallthru
        _
      // Predicated region
      $region21: #{basic_block_forward.1} parent=11 // pred_check
        %p234 = pneg %p103
      $region22: #{basic_block_forward.1} parent=11 // pred_check_branch
        %236 = sbr.rel (%p234) target = $region24
      $region23: #{basic_block_forward.1} parent=11 // pred_region
        _
      $region24: #{basic_block_forward.1} parent=11 // pred_fallthru
        _
      // Predicated region
      $region25: #{basic_block_forward.1} parent=11 // pred_check
        %p237 = pneg %p124
      $region26: #{basic_block_forward.1} parent=11 // pred_check_branch
        %239 = sbr.rel (%p237) target = $region28
      $region27: #{basic_block_forward.1} parent=11 // pred_region
        _
      $region28: #{basic_block_forward.1} parent=11 // pred_fallthru
        _
      // Predicated region
      $region29: #{basic_block_forward.1} parent=11 // pred_check
        %p240 = pneg %p145
      $region30: #{basic_block_forward.1} parent=11 // pred_check_branch
        %242 = sbr.rel (%p240) target = $region32
      $region31: #{basic_block_forward.1} parent=11 // pred_region
        _
      $region32: #{basic_block_forward.1} parent=11 // pred_fallthru
        _
      // Predicated region
      $region33: #{basic_block_forward.1} parent=11 // pred_check
        %p243 = pneg %p166
      $region34: #{basic_block_forward.1} parent=11 // pred_check_branch
        %245 = sbr.rel (%p243) target = $region36
      $region35: #{basic_block_forward.1} parent=11 // pred_region
        _
      $region36: #{basic_block_forward.1} parent=11 // pred_fallthru
        _
      // Predicated region
      $region37: #{basic_block_forward.1} parent=11 // pred_check
        %p246 = pneg %p187
      $region38: #{basic_block_forward.1} parent=11 // pred_check_branch
        %248 = sbr.rel (%p246) target = $region40
      $region39: #{basic_block_forward.1} parent=11 // pred_region
        _
      $region40: #{basic_block_forward.1} parent=11 // pred_fallthru
        _
    $region12: #{basic_block_forward.1} parent=5 // pred_fallthru
      _
    %p249 = scmp.lt.s32.totalorder %s14, 2
    // Predicated region
    $region41: #{basic_block_forward.1} parent=5 // pred_check
      %p250 = pneg %p249
    $region42: #{basic_block_forward.1} parent=5 // pred_check_branch
      %252 = sbr.rel (%p250) target = $region44
    $region43: #{basic_block_forward.1} parent=5 // pred_region
      // Predicated region
      $region45: #{basic_block_forward.1} parent=43 // pred_check
        %p253 = pneg %p34
      $region46: #{basic_block_forward.1} parent=43 // pred_check_branch
        %255 = sbr.rel (%p253) target = $region48
      $region47: #{basic_block_forward.1} parent=43 // pred_region
        %s256 = smul.u32 16, %s14
        %p257 = scmp.lt.s32.totalorder %s256, 31
        %s258 = scalar_select %p257, %s256, 31
        %s259 = smul.addr %s258, 8
        %s260 = scalar_lea.vmem %s0, %s259
        %s261 = smul.u32 16, %s14
      $region48: #{basic_block_forward.1} parent=43 // pred_fallthru
        _
    $region44: #{basic_block_forward.1} parent=5 // pred_fallthru
      _
    %p262 = scmp.le.s32.totalorder 1, %s14
    %p263 = scmp.lt.s32.totalorder %s14, 3
    %p264 = pnand %p262, %p263
    %p265 = pneg %p264
    // Predicated region
    $region49: #{basic_block_forward.1} parent=5 // pred_check
      _
    $region50: #{basic_block_forward.1} parent=5 // pred_check_branch
      %267 = sbr.rel (%p264) target = $region52
    $region51: #{basic_block_forward.1} parent=5 // pred_region
      %s268 = ssub.s32 %s14, 1
      %s269 = smul.u32 16, %s19
      %p270 = scmp.lt.s32.totalorder %s269, 31
      %s271 = scalar_select %p270, %s269, 31
      %s272 = smul.addr %s271, 8
      %s273 = scalar_lea.vmem %s0, %s272
      %p274 = pneg %p40
      %p275 = pneg %p37
      %p276 = pneg %p61
      %p277 = pneg %p58
      %p278 = pneg %p82
      %p279 = pneg %p79
      %p280 = pneg %p103
      %p281 = pneg %p100
      %p282 = pneg %p124
      %p283 = pneg %p121
      %p284 = pneg %p145
      %p285 = pneg %p142
      %p286 = pneg %p166
      %p287 = pneg %p163
      %p288 = pneg %p187
      %p289 = pneg %p184
      %p290 = pneg %p213
      %p291 = pneg %p210
      %s292 = smul.u32 16, %s19
      %p293 = scmp.lt.s32.totalorder %s292, 31
      %s294 = scalar_select %p293, %s292, 31
      %s295 = smul.addr %s294, 8
      %s296 = scalar_lea.vmem %s8, %s295
      %s297 = smul.u32 16, %s19
      %p298 = scmp.lt.s32.totalorder %s297, 31
      %s299 = scalar_select %p298, %s297, 31
      %s300 = smul.addr %s299, 8
      %s301 = scalar_lea.vmem %s0, %s300
      %s302 = smul.u32 16, %s19
      %s303 = smul.u32 16, %s19
      %p304 = scmp.lt.s32.totalorder %s303, 31
      %s305 = scalar_select %p304, %s303, 31
      %s306 = smul.addr %s305, 8
      %s307 = scalar_lea.vmem %s8, %s306
      %s308 = smul.u32 16, %s19
      %v309 = vld [vmem:[%s301] sm:$0xff]
      %v310 = vld [vmem:[%s301 + $0x8] sm:$0xff]
      %v311 = vld [vmem:[%s301 + $0x10] sm:$0xff]
      %v312 = vld [vmem:[%s301 + $0x18] sm:$0xff]
      %v313 = vld [vmem:[%s301 + $0x20] sm:$0xff]
      %v314 = vld [vmem:[%s301 + $0x28] sm:$0xff]
      %v315 = vld [vmem:[%s301 + $0x30] sm:$0xff]
      %v316 = vld [vmem:[%s301 + $0x38] sm:$0xff]
      %v317 = vld [vmem:[%s301 + $0x40] sm:$0xff]
      %v318 = vld [vmem:[%s301 + $0x48] sm:$0xff]
      %v319 = vld [vmem:[%s301 + $0x50] sm:$0xff]
      %v320 = vld [vmem:[%s301 + $0x58] sm:$0xff]
      %v321 = vld [vmem:[%s301 + $0x60] sm:$0xff]
      %v322 = vld [vmem:[%s301 + $0x68] sm:$0xff]
      %v323 = vld [vmem:[%s301 + $0x70] sm:$0xff]
      %v324 = vld [vmem:[%s301 + $0x78] sm:$0xff]
      %v325 = vld [vmem:[%s1] sm:$0xff]
      %v326 = vld [vmem:[%s1 + $0x8] sm:$0xff]
      %v327 = vld [vmem:[%s1 + $0x10] sm:$0xff]
      %v328 = vld [vmem:[%s1 + $0x18] sm:$0xff]
      %v329 = vld [vmem:[%s1 + $0x20] sm:$0xff]
      %v330 = vld [vmem:[%s1 + $0x28] sm:$0xff]
      %v331 = vld [vmem:[%s1 + $0x30] sm:$0xff]
      %v332 = vld [vmem:[%s1 + $0x38] sm:$0xff]
      %v333 = vld [vmem:[%s1 + $0x40] sm:$0xff]
      %v334 = vld [vmem:[%s1 + $0x48] sm:$0xff]
      %v335 = vld [vmem:[%s1 + $0x50] sm:$0xff]
      %v336 = vld [vmem:[%s1 + $0x58] sm:$0xff]
      %v337 = vld [vmem:[%s1 + $0x60] sm:$0xff]
      %v338 = vld [vmem:[%s1 + $0x68] sm:$0xff]
      %v339 = vld [vmem:[%s1 + $0x70] sm:$0xff]
      %v340 = vld [vmem:[%s1 + $0x78] sm:$0xff]
      %s341 = scalar_lea.vmem %s1, 128
      %v342 = vld [vmem:[%s341] sm:$0xff]
      %v343 = vld [vmem:[%s341 + $0x8] sm:$0xff]
      %v344 = vld [vmem:[%s341 + $0x10] sm:$0xff]
      %v345 = vld [vmem:[%s341 + $0x18] sm:$0xff]
      %v346 = vld [vmem:[%s341 + $0x20] sm:$0xff]
      %v347 = vld [vmem:[%s341 + $0x28] sm:$0xff]
      %v348 = vld [vmem:[%s341 + $0x30] sm:$0xff]
      %v349 = vld [vmem:[%s341 + $0x38] sm:$0xff]
      %v350 = vld [vmem:[%s341 + $0x40] sm:$0xff]
      %v351 = vld [vmem:[%s341 + $0x48] sm:$0xff]
      %v352 = vld [vmem:[%s341 + $0x50] sm:$0xff]
      %v353 = vld [vmem:[%s341 + $0x58] sm:$0xff]
      %v354 = vld [vmem:[%s341 + $0x60] sm:$0xff]
      %v355 = vld [vmem:[%s341 + $0x68] sm:$0xff]
      %v356 = vld [vmem:[%s341 + $0x70] sm:$0xff]
      %v357 = vld [vmem:[%s341 + $0x78] sm:$0xff]
      %v358 = vld [vmem:[%s5] sm:$0xff]
      %v359 = vld [vmem:[%s6] sm:$0xff]
      %v360 = vld [vmem:[%s6 + $0x8] sm:$0xff]
      %v361 = vld [vmem:[%s6 + $0x10] sm:$0xff]
      %v362 = vld [vmem:[%s6 + $0x18] sm:$0xff]
      %v363 = vld [vmem:[%s6 + $0x20] sm:$0xff]
      %v364 = vld [vmem:[%s6 + $0x28] sm:$0xff]
      %v365 = vld [vmem:[%s6 + $0x30] sm:$0xff]
      %v366 = vld [vmem:[%s6 + $0x38] sm:$0xff]
      %v367 = vld [vmem:[%s6 + $0x40] sm:$0xff]
      %v368 = vld [vmem:[%s6 + $0x48] sm:$0xff]
      %v369 = vld [vmem:[%s6 + $0x50] sm:$0xff]
      %v370 = vld [vmem:[%s6 + $0x58] sm:$0xff]
      %v371 = vld [vmem:[%s6 + $0x60] sm:$0xff]
      %v372 = vld [vmem:[%s6 + $0x68] sm:$0xff]
      %v373 = vld [vmem:[%s6 + $0x70] sm:$0xff]
      %v374 = vld [vmem:[%s6 + $0x78] sm:$0xff]
      %v375 = vld [vmem:[%s4] sm:$0xff]
      %v376 = vld [vmem:[%s4 + $0x8] sm:$0xff]
      %v377 = vld [vmem:[%s4 + $0x10] sm:$0xff]
      %v378 = vld [vmem:[%s4 + $0x18] sm:$0xff]
      %v379 = vld [vmem:[%s4 + $0x20] sm:$0xff]
      %v380 = vld [vmem:[%s4 + $0x28] sm:$0xff]
      %v381 = vld [vmem:[%s4 + $0x30] sm:$0xff]
      %v382 = vld [vmem:[%s4 + $0x38] sm:$0xff]
      %v383 = vld [vmem:[%s4 + $0x40] sm:$0xff]
      %v384 = vld [vmem:[%s4 + $0x48] sm:$0xff]
      %v385 = vld [vmem:[%s4 + $0x50] sm:$0xff]
      %v386 = vld [vmem:[%s4 + $0x58] sm:$0xff]
      %v387 = vld [vmem:[%s4 + $0x60] sm:$0xff]
      %v388 = vld [vmem:[%s4 + $0x68] sm:$0xff]
      %v389 = vld [vmem:[%s4 + $0x70] sm:$0xff]
      %v390 = vld [vmem:[%s4 + $0x78] sm:$0xff]
      %v391 = vld [vmem:[%s7] sm:$0xff]
      %392 = vmatpush.msra.mxu0 %v324
      %393 = vmatpush.msra.mxu0 %v323
      %394 = vmatpush.msra.mxu0 %v322
      %395 = vmatpush.msra.mxu0 %v321
      %396 = vmatpush.msra.mxu0 %v320
      %397 = vmatpush.msra.mxu0 %v319
      %398 = vmatpush.msra.mxu0 %v318
      %399 = vmatpush.msra.mxu0 %v317
      %400 = vmatpush.msra.mxu0 %v316
      %401 = vmatpush.msra.mxu0 %v315
      %402 = vmatpush.msra.mxu0 %v314
      %403 = vmatpush.msra.mxu0 %v313
      %404 = vmatpush.msra.mxu0 %v312
      %405 = vmatpush.msra.mxu0 %v311
      %406 = vmatpush.msra.mxu0 %v310
      %407 = vmatpush.msra.mxu0 %v309
      %408 = vmatmul.f32.gmra.mxu0 %v325
      %v409 = vpop.f32.mrf.mxu0
      %v410 = vadd.f32 0.0, %v409
      %411 = vmatmul.f32.gmra.mxu0 %v326
      %v412 = vpop.f32.mrf.mxu0
      %v413 = vadd.f32 0.0, %v412
      %414 = vmatmul.f32.gmra.mxu0 %v327
      %v415 = vpop.f32.mrf.mxu0
      %v416 = vadd.f32 0.0, %v415
      %417 = vmatmul.f32.gmra.mxu0 %v328
      %v418 = vpop.f32.mrf.mxu0
      %v419 = vadd.f32 0.0, %v418
      %420 = vmatmul.f32.gmra.mxu0 %v329
      %v421 = vpop.f32.mrf.mxu0
      %v422 = vadd.f32 0.0, %v421
      %423 = vmatmul.f32.gmra.mxu0 %v330
      %v424 = vpop.f32.mrf.mxu0
      %v425 = vadd.f32 0.0, %v424
      %426 = vmatmul.f32.gmra.mxu0 %v331
      %v427 = vpop.f32.mrf.mxu0
      %v428 = vadd.f32 0.0, %v427
      %429 = vmatmul.f32.gmra.mxu0 %v332
      %v430 = vpop.f32.mrf.mxu0
      %v431 = vadd.f32 0.0, %v430
      %432 = vmatmul.f32.gmra.mxu0 %v333
      %v433 = vpop.f32.mrf.mxu0
      %v434 = vadd.f32 0.0, %v433
      %435 = vmatmul.f32.gmra.mxu0 %v334
      %v436 = vpop.f32.mrf.mxu0
      %v437 = vadd.f32 0.0, %v436
      %438 = vmatmul.f32.gmra.mxu0 %v335
      %v439 = vpop.f32.mrf.mxu0
      %v440 = vadd.f32 0.0, %v439
      %441 = vmatmul.f32.gmra.mxu0 %v336
      %v442 = vpop.f32.mrf.mxu0
      %v443 = vadd.f32 0.0, %v442
      %444 = vmatmul.f32.gmra.mxu0 %v337
      %v445 = vpop.f32.mrf.mxu0
      %v446 = vadd.f32 0.0, %v445
      %447 = vmatmul.f32.gmra.mxu0 %v338
      %v448 = vpop.f32.mrf.mxu0
      %v449 = vadd.f32 0.0, %v448
      %450 = vmatmul.f32.gmra.mxu0 %v339
      %v451 = vpop.f32.mrf.mxu0
      %v452 = vadd.f32 0.0, %v451
      %453 = vmatmul.f32.gmra.mxu0 %v340
      %v454 = vpop.f32.mrf.mxu0
      %v455 = vadd.f32 0.0, %v454
      %456 = vdwg.mxu0
      %457 = vmatpush.msra.mxu0 %v324
      %458 = vmatpush.msra.mxu0 %v323
      %459 = vmatpush.msra.mxu0 %v322
      %460 = vmatpush.msra.mxu0 %v321
      %461 = vmatpush.msra.mxu0 %v320
      %462 = vmatpush.msra.mxu0 %v319
      %463 = vmatpush.msra.mxu0 %v318
      %464 = vmatpush.msra.mxu0 %v317
      %465 = vmatpush.msra.mxu0 %v316
      %466 = vmatpush.msra.mxu0 %v315
      %467 = vmatpush.msra.mxu0 %v314
      %468 = vmatpush.msra.mxu0 %v313
      %469 = vmatpush.msra.mxu0 %v312
      %470 = vmatpush.msra.mxu0 %v311
      %471 = vmatpush.msra.mxu0 %v310
      %472 = vmatpush.msra.mxu0 %v309
      %473 = vmatmul.f32.gmra.mxu0 %v342
      %v474 = vpop.f32.mrf.mxu0
      %v475 = vadd.f32 0.0, %v474
      %476 = vmatmul.f32.gmra.mxu0 %v343
      %v477 = vpop.f32.mrf.mxu0
      %v478 = vadd.f32 0.0, %v477
      %479 = vmatmul.f32.gmra.mxu0 %v344
      %v480 = vpop.f32.mrf.mxu0
      %v481 = vadd.f32 0.0, %v480
      %482 = vmatmul.f32.gmra.mxu0 %v345
      %v483 = vpop.f32.mrf.mxu0
      %v484 = vadd.f32 0.0, %v483
      %485 = vmatmul.f32.gmra.mxu0 %v346
      %v486 = vpop.f32.mrf.mxu0
      %v487 = vadd.f32 0.0, %v486
      %488 = vmatmul.f32.gmra.mxu0 %v347
      %v489 = vpop.f32.mrf.mxu0
      %v490 = vadd.f32 0.0, %v489
      %491 = vmatmul.f32.gmra.mxu0 %v348
      %v492 = vpop.f32.mrf.mxu0
      %v493 = vadd.f32 0.0, %v492
      %494 = vmatmul.f32.gmra.mxu0 %v349
      %v495 = vpop.f32.mrf.mxu0
      %v496 = vadd.f32 0.0, %v495
      %497 = vmatmul.f32.gmra.mxu0 %v350
      %v498 = vpop.f32.mrf.mxu0
      %v499 = vadd.f32 0.0, %v498
      %500 = vmatmul.f32.gmra.mxu0 %v351
      %v501 = vpop.f32.mrf.mxu0
      %v502 = vadd.f32 0.0, %v501
      %503 = vmatmul.f32.gmra.mxu0 %v352
      %v504 = vpop.f32.mrf.mxu0
      %v505 = vadd.f32 0.0, %v504
      %506 = vmatmul.f32.gmra.mxu0 %v353
      %v507 = vpop.f32.mrf.mxu0
      %v508 = vadd.f32 0.0, %v507
      %509 = vmatmul.f32.gmra.mxu0 %v354
      %v510 = vpop.f32.mrf.mxu0
      %v511 = vadd.f32 0.0, %v510
      %512 = vmatmul.f32.gmra.mxu0 %v355
      %v513 = vpop.f32.mrf.mxu0
      %v514 = vadd.f32 0.0, %v513
      %515 = vmatmul.f32.gmra.mxu0 %v356
      %v516 = vpop.f32.mrf.mxu0
      %v517 = vadd.f32 0.0, %v516
      %518 = vmatmul.f32.gmra.mxu0 %v357
      %v519 = vpop.f32.mrf.mxu0
      %v520 = vadd.f32 0.0, %v519
      %521 = vdwg.mxu0
      %v522 = vld [vmem:[%s2 + $0x8] sm:$0xff]
      %v523 = vld [vmem:[%s2 + $0x10] sm:$0xff]
      %v524 = vld [vmem:[%s2 + $0x28] sm:$0xff]
      %v525 = vld [vmem:[%s2 + $0x30] sm:$0xff]
      %v526 = vld [vmem:[%s2 + $0x48] sm:$0xff]
      %v527 = vld [vmem:[%s2 + $0x50] sm:$0xff]
      %v528 = vld [vmem:[%s2 + $0x68] sm:$0xff]
      %v529 = vld [vmem:[%s2 + $0x70] sm:$0xff]
      %v530 = vld [vmem:[%s2 + $0x88] sm:$0xff]
      %v531 = vld [vmem:[%s2 + $0x90] sm:$0xff]
      %v532 = vld [vmem:[%s2 + $0xa8] sm:$0xff]
      %v533 = vld [vmem:[%s2 + $0xb0] sm:$0xff]
      %v534 = vld [vmem:[%s2 + $0xc8] sm:$0xff]
      %v535 = vld [vmem:[%s2 + $0xd0] sm:$0xff]
      %v536 = vld [vmem:[%s2 + $0xe8] sm:$0xff]
      %v537 = vld [vmem:[%s2 + $0xf0] sm:$0xff]
      %vm538 = vcmask 523264
      %v540 = vsel %vm538, %v309, 0
      %v543 = vsel %vm538, %v310, 0
      %v546 = vsel %vm538, %v311, 0
      %v549 = vsel %vm538, %v312, 0
      %v552 = vsel %vm538, %v313, 0
      %v555 = vsel %vm538, %v314, 0
      %v558 = vsel %vm538, %v315, 0
      %v561 = vsel %vm538, %v316, 0
      %v564 = vsel %vm538, %v317, 0
      %v567 = vsel %vm538, %v318, 0
      %v570 = vsel %vm538, %v319, 0
      %v573 = vsel %vm538, %v320, 0
      %v576 = vsel %vm538, %v321, 0
      %v579 = vsel %vm538, %v322, 0
      %v582 = vsel %vm538, %v323, 0
      %v585 = vsel %vm538, %v324, 0
      %587 = vmatpush.msra.mxu0 0.0
      %588 = vmatpush.msra.mxu0 0.0
      %589 = vmatpush.msra.mxu0 0.0
      %590 = vmatpush.msra.mxu0 0.0
      %591 = vmatpush.msra.mxu0 0.0
      %592 = vmatpush.msra.mxu0 0.0
      %593 = vmatpush.msra.mxu0 0.0
      %594 = vmatpush.msra.mxu0 0.0
      %595 = vmatpush.msra.mxu0 %v536
      %596 = vmatpush.msra.mxu0 %v534
      %597 = vmatpush.msra.mxu0 %v532
      %598 = vmatpush.msra.mxu0 %v530
      %599 = vmatpush.msra.mxu0 %v528
      %600 = vmatpush.msra.mxu0 %v526
      %601 = vmatpush.msra.mxu0 %v524
      %602 = vmatpush.msra.mxu0 %v522
      %603 = vmatmul.f32.gmra.mxu0 %v540
      %v604 = vpop.f32.mrf.mxu0
      %v605 = vadd.f32 0.0, %v604
      %606 = vmatmul.f32.gmra.mxu0 %v543
      %v607 = vpop.f32.mrf.mxu0
      %v608 = vadd.f32 0.0, %v607
      %609 = vmatmul.f32.gmra.mxu0 %v546
      %v610 = vpop.f32.mrf.mxu0
      %v611 = vadd.f32 0.0, %v610
      %612 = vmatmul.f32.gmra.mxu0 %v549
      %v613 = vpop.f32.mrf.mxu0
      %v614 = vadd.f32 0.0, %v613
      %615 = vmatmul.f32.gmra.mxu0 %v552
      %v616 = vpop.f32.mrf.mxu0
      %v617 = vadd.f32 0.0, %v616
      %618 = vmatmul.f32.gmra.mxu0 %v555
      %v619 = vpop.f32.mrf.mxu0
      %v620 = vadd.f32 0.0, %v619
      %621 = vmatmul.f32.gmra.mxu0 %v558
      %v622 = vpop.f32.mrf.mxu0
      %v623 = vadd.f32 0.0, %v622
      %624 = vmatmul.f32.gmra.mxu0 %v561
      %v625 = vpop.f32.mrf.mxu0
      %v626 = vadd.f32 0.0, %v625
      %627 = vmatmul.f32.gmra.mxu0 %v564
      %v628 = vpop.f32.mrf.mxu0
      %v629 = vadd.f32 0.0, %v628
      %630 = vmatmul.f32.gmra.mxu0 %v567
      %v631 = vpop.f32.mrf.mxu0
      %v632 = vadd.f32 0.0, %v631
      %633 = vmatmul.f32.gmra.mxu0 %v570
      %v634 = vpop.f32.mrf.mxu0
      %v635 = vadd.f32 0.0, %v634
      %636 = vmatmul.f32.gmra.mxu0 %v573
      %v637 = vpop.f32.mrf.mxu0
      %v638 = vadd.f32 0.0, %v637
      %639 = vmatmul.f32.gmra.mxu0 %v576
      %v640 = vpop.f32.mrf.mxu0
      %v641 = vadd.f32 0.0, %v640
      %642 = vmatmul.f32.gmra.mxu0 %v579
      %v643 = vpop.f32.mrf.mxu0
      %v644 = vadd.f32 0.0, %v643
      %645 = vmatmul.f32.gmra.mxu0 %v582
      %v646 = vpop.f32.mrf.mxu0
      %v647 = vadd.f32 0.0, %v646
      %648 = vmatmul.f32.gmra.mxu0 %v585
      %v649 = vpop.f32.mrf.mxu0
      %v650 = vadd.f32 0.0, %v649
      %651 = vdwg.mxu0
      %652 = vmatpush.msra.mxu0 0.0
      %653 = vmatpush.msra.mxu0 0.0
      %654 = vmatpush.msra.mxu0 0.0
      %655 = vmatpush.msra.mxu0 0.0
      %656 = vmatpush.msra.mxu0 0.0
      %657 = vmatpush.msra.mxu0 0.0
      %658 = vmatpush.msra.mxu0 0.0
      %659 = vmatpush.msra.mxu0 0.0
      %660 = vmatpush.msra.mxu0 %v537
      %661 = vmatpush.msra.mxu0 %v535
      %662 = vmatpush.msra.mxu0 %v533
      %663 = vmatpush.msra.mxu0 %v531
      %664 = vmatpush.msra.mxu0 %v529
      %665 = vmatpush.msra.mxu0 %v527
      %666 = vmatpush.msra.mxu0 %v525
      %667 = vmatpush.msra.mxu0 %v523
      %668 = vmatmul.f32.gmra.mxu0 %v540
      %v669 = vpop.f32.mrf.mxu0
      %v670 = vadd.f32 0.0, %v669
      %671 = vmatmul.f32.gmra.mxu0 %v543
      %v672 = vpop.f32.mrf.mxu0
      %v673 = vadd.f32 0.0, %v672
      %674 = vmatmul.f32.gmra.mxu0 %v546
      %v675 = vpop.f32.mrf.mxu0
      %v676 = vadd.f32 0.0, %v675
      %677 = vmatmul.f32.gmra.mxu0 %v549
      %v678 = vpop.f32.mrf.mxu0
      %v679 = vadd.f32 0.0, %v678
      %680 = vmatmul.f32.gmra.mxu0 %v552
      %v681 = vpop.f32.mrf.mxu0
      %v682 = vadd.f32 0.0, %v681
      %683 = vmatmul.f32.gmra.mxu0 %v555
      %v684 = vpop.f32.mrf.mxu0
      %v685 = vadd.f32 0.0, %v684
      %686 = vmatmul.f32.gmra.mxu0 %v558
      %v687 = vpop.f32.mrf.mxu0
      %v688 = vadd.f32 0.0, %v687
      %689 = vmatmul.f32.gmra.mxu0 %v561
      %v690 = vpop.f32.mrf.mxu0
      %v691 = vadd.f32 0.0, %v690
      %692 = vmatmul.f32.gmra.mxu0 %v564
      %v693 = vpop.f32.mrf.mxu0
      %v694 = vadd.f32 0.0, %v693
      %695 = vmatmul.f32.gmra.mxu0 %v567
      %v696 = vpop.f32.mrf.mxu0
      %v697 = vadd.f32 0.0, %v696
      %698 = vmatmul.f32.gmra.mxu0 %v570
      %v699 = vpop.f32.mrf.mxu0
      %v700 = vadd.f32 0.0, %v699
      %701 = vmatmul.f32.gmra.mxu0 %v573
      %v702 = vpop.f32.mrf.mxu0
      %v703 = vadd.f32 0.0, %v702
      %704 = vmatmul.f32.gmra.mxu0 %v576
      %v705 = vpop.f32.mrf.mxu0
      %v706 = vadd.f32 0.0, %v705
      %707 = vmatmul.f32.gmra.mxu0 %v579
      %v708 = vpop.f32.mrf.mxu0
      %v709 = vadd.f32 0.0, %v708
      %710 = vmatmul.f32.gmra.mxu0 %v582
      %v711 = vpop.f32.mrf.mxu0
      %v712 = vadd.f32 0.0, %v711
      %713 = vmatmul.f32.gmra.mxu0 %v585
      %v714 = vpop.f32.mrf.mxu0
      %v715 = vadd.f32 0.0, %v714
      %716 = vdwg.mxu0
      %v717 = vld [vmem:[%s2] sm:$0xff]
      %v718 = vld [vmem:[%s2 + $0x20] sm:$0xff]
      %v719 = vld [vmem:[%s2 + $0x40] sm:$0xff]
      %v720 = vld [vmem:[%s2 + $0x60] sm:$0xff]
      %v721 = vld [vmem:[%s2 + $0x80] sm:$0xff]
      %v722 = vld [vmem:[%s2 + $0xa0] sm:$0xff]
      %v723 = vld [vmem:[%s2 + $0xc0] sm:$0xff]
      %v724 = vld [vmem:[%s2 + $0xe0] sm:$0xff]
      %v726 = vsel %vm538, %v410, 0
      %v729 = vsel %vm538, %v413, 0
      %v732 = vsel %vm538, %v416, 0
      %v735 = vsel %vm538, %v419, 0
      %v738 = vsel %vm538, %v422, 0
      %v741 = vsel %vm538, %v425, 0
      %v744 = vsel %vm538, %v428, 0
      %v747 = vsel %vm538, %v431, 0
      %v750 = vsel %vm538, %v434, 0
      %v753 = vsel %vm538, %v437, 0
      %v756 = vsel %vm538, %v440, 0
      %v759 = vsel %vm538, %v443, 0
      %v762 = vsel %vm538, %v446, 0
      %v765 = vsel %vm538, %v449, 0
      %v768 = vsel %vm538, %v452, 0
      %v771 = vsel %vm538, %v455, 0
      %773 = vmatpush.msra.mxu0 0.0
      %774 = vmatpush.msra.mxu0 0.0
      %775 = vmatpush.msra.mxu0 0.0
      %776 = vmatpush.msra.mxu0 0.0
      %777 = vmatpush.msra.mxu0 0.0
      %778 = vmatpush.msra.mxu0 0.0
      %779 = vmatpush.msra.mxu0 0.0
      %780 = vmatpush.msra.mxu0 0.0
      %781 = vmatpush.msra.mxu0 %v724
      %782 = vmatpush.msra.mxu0 %v723
      %783 = vmatpush.msra.mxu0 %v722
      %784 = vmatpush.msra.mxu0 %v721
      %785 = vmatpush.msra.mxu0 %v720
      %786 = vmatpush.msra.mxu0 %v719
      %787 = vmatpush.msra.mxu0 %v718
      %788 = vmatpush.msra.mxu0 %v717
      %789 = vmatmul.f32.gmra.mxu0 %v726
      %v790 = vpop.f32.mrf.mxu0
      %v791 = vadd.f32 0.0, %v790
      %792 = vmatmul.f32.gmra.mxu0 %v729
      %v793 = vpop.f32.mrf.mxu0
      %v794 = vadd.f32 0.0, %v793
      %795 = vmatmul.f32.gmra.mxu0 %v732
      %v796 = vpop.f32.mrf.mxu0
      %v797 = vadd.f32 0.0, %v796
      %798 = vmatmul.f32.gmra.mxu0 %v735
      %v799 = vpop.f32.mrf.mxu0
      %v800 = vadd.f32 0.0, %v799
      %801 = vmatmul.f32.gmra.mxu0 %v738
      %v802 = vpop.f32.mrf.mxu0
      %v803 = vadd.f32 0.0, %v802
      %804 = vmatmul.f32.gmra.mxu0 %v741
      %v805 = vpop.f32.mrf.mxu0
      %v806 = vadd.f32 0.0, %v805
      %807 = vmatmul.f32.gmra.mxu0 %v744
      %v808 = vpop.f32.mrf.mxu0
      %v809 = vadd.f32 0.0, %v808
      %810 = vmatmul.f32.gmra.mxu0 %v747
      %v811 = vpop.f32.mrf.mxu0
      %v812 = vadd.f32 0.0, %v811
      %813 = vmatmul.f32.gmra.mxu0 %v750
      %v814 = vpop.f32.mrf.mxu0
      %v815 = vadd.f32 0.0, %v814
      %816 = vmatmul.f32.gmra.mxu0 %v753
      %v817 = vpop.f32.mrf.mxu0
      %v818 = vadd.f32 0.0, %v817
      %819 = vmatmul.f32.gmra.mxu0 %v756
      %v820 = vpop.f32.mrf.mxu0
      %v821 = vadd.f32 0.0, %v820
      %822 = vmatmul.f32.gmra.mxu0 %v759
      %v823 = vpop.f32.mrf.mxu0
      %v824 = vadd.f32 0.0, %v823
      %825 = vmatmul.f32.gmra.mxu0 %v762
      %v826 = vpop.f32.mrf.mxu0
      %v827 = vadd.f32 0.0, %v826
      %828 = vmatmul.f32.gmra.mxu0 %v765
      %v829 = vpop.f32.mrf.mxu0
      %v830 = vadd.f32 0.0, %v829
      %831 = vmatmul.f32.gmra.mxu0 %v768
      %v832 = vpop.f32.mrf.mxu0
      %v833 = vadd.f32 0.0, %v832
      %834 = vmatmul.f32.gmra.mxu0 %v771
      %v835 = vpop.f32.mrf.mxu0
      %v836 = vadd.f32 0.0, %v835
      %837 = vdwg.mxu0
      %v838 = vadd.f32 %v605, %v791
      %v839 = vadd.f32 %v608, %v794
      %v840 = vadd.f32 %v611, %v797
      %v841 = vadd.f32 %v614, %v800
      %v842 = vadd.f32 %v617, %v803
      %v843 = vadd.f32 %v620, %v806
      %v844 = vadd.f32 %v623, %v809
      %v845 = vadd.f32 %v626, %v812
      %v846 = vadd.f32 %v629, %v815
      %v847 = vadd.f32 %v632, %v818
      %v848 = vadd.f32 %v635, %v821
      %v849 = vadd.f32 %v638, %v824
      %v850 = vadd.f32 %v641, %v827
      %v851 = vadd.f32 %v644, %v830
      %v852 = vadd.f32 %v647, %v833
      %v853 = vadd.f32 %v650, %v836
      %v854 = vld [vmem:[%s2 + $0x18] sm:$0xff]
      %v855 = vld [vmem:[%s2 + $0x38] sm:$0xff]
      %v856 = vld [vmem:[%s2 + $0x58] sm:$0xff]
      %v857 = vld [vmem:[%s2 + $0x78] sm:$0xff]
      %v858 = vld [vmem:[%s2 + $0x98] sm:$0xff]
      %v859 = vld [vmem:[%s2 + $0xb8] sm:$0xff]
      %v860 = vld [vmem:[%s2 + $0xd8] sm:$0xff]
      %v861 = vld [vmem:[%s2 + $0xf8] sm:$0xff]
      %v863 = vsel %vm538, %v475, 0
      %v866 = vsel %vm538, %v478, 0
      %v869 = vsel %vm538, %v481, 0
      %v872 = vsel %vm538, %v484, 0
      %v875 = vsel %vm538, %v487, 0
      %v878 = vsel %vm538, %v490, 0
      %v881 = vsel %vm538, %v493, 0
      %v884 = vsel %vm538, %v496, 0
      %v887 = vsel %vm538, %v499, 0
      %v890 = vsel %vm538, %v502, 0
      %v893 = vsel %vm538, %v505, 0
      %v896 = vsel %vm538, %v508, 0
      %v899 = vsel %vm538, %v511, 0
      %v902 = vsel %vm538, %v514, 0
      %v905 = vsel %vm538, %v517, 0
      %v908 = vsel %vm538, %v520, 0
      %910 = vmatpush.msra.mxu0 0.0
      %911 = vmatpush.msra.mxu0 0.0
      %912 = vmatpush.msra.mxu0 0.0
      %913 = vmatpush.msra.mxu0 0.0
      %914 = vmatpush.msra.mxu0 0.0
      %915 = vmatpush.msra.mxu0 0.0
      %916 = vmatpush.msra.mxu0 0.0
      %917 = vmatpush.msra.mxu0 0.0
      %918 = vmatpush.msra.mxu0 %v861
      %919 = vmatpush.msra.mxu0 %v860
      %920 = vmatpush.msra.mxu0 %v859
      %921 = vmatpush.msra.mxu0 %v858
      %922 = vmatpush.msra.mxu0 %v857
      %923 = vmatpush.msra.mxu0 %v856
      %924 = vmatpush.msra.mxu0 %v855
      %925 = vmatpush.msra.mxu0 %v854
      %926 = vmatmul.f32.gmra.mxu0 %v863
      %v927 = vpop.f32.mrf.mxu0
      %v928 = vadd.f32 0.0, %v927
      %929 = vmatmul.f32.gmra.mxu0 %v866
      %v930 = vpop.f32.mrf.mxu0
      %v931 = vadd.f32 0.0, %v930
      %932 = vmatmul.f32.gmra.mxu0 %v869
      %v933 = vpop.f32.mrf.mxu0
      %v934 = vadd.f32 0.0, %v933
      %935 = vmatmul.f32.gmra.mxu0 %v872
      %v936 = vpop.f32.mrf.mxu0
      %v937 = vadd.f32 0.0, %v936
      %938 = vmatmul.f32.gmra.mxu0 %v875
      %v939 = vpop.f32.mrf.mxu0
      %v940 = vadd.f32 0.0, %v939
      %941 = vmatmul.f32.gmra.mxu0 %v878
      %v942 = vpop.f32.mrf.mxu0
      %v943 = vadd.f32 0.0, %v942
      %944 = vmatmul.f32.gmra.mxu0 %v881
      %v945 = vpop.f32.mrf.mxu0
      %v946 = vadd.f32 0.0, %v945
      %947 = vmatmul.f32.gmra.mxu0 %v884
      %v948 = vpop.f32.mrf.mxu0
      %v949 = vadd.f32 0.0, %v948
      %950 = vmatmul.f32.gmra.mxu0 %v887
      %v951 = vpop.f32.mrf.mxu0
      %v952 = vadd.f32 0.0, %v951
      %953 = vmatmul.f32.gmra.mxu0 %v890
      %v954 = vpop.f32.mrf.mxu0
      %v955 = vadd.f32 0.0, %v954
      %956 = vmatmul.f32.gmra.mxu0 %v893
      %v957 = vpop.f32.mrf.mxu0
      %v958 = vadd.f32 0.0, %v957
      %959 = vmatmul.f32.gmra.mxu0 %v896
      %v960 = vpop.f32.mrf.mxu0
      %v961 = vadd.f32 0.0, %v960
      %962 = vmatmul.f32.gmra.mxu0 %v899
      %v963 = vpop.f32.mrf.mxu0
      %v964 = vadd.f32 0.0, %v963
      %965 = vmatmul.f32.gmra.mxu0 %v902
      %v966 = vpop.f32.mrf.mxu0
      %v967 = vadd.f32 0.0, %v966
      %968 = vmatmul.f32.gmra.mxu0 %v905
      %v969 = vpop.f32.mrf.mxu0
      %v970 = vadd.f32 0.0, %v969
      %971 = vmatmul.f32.gmra.mxu0 %v908
      %v972 = vpop.f32.mrf.mxu0
      %v973 = vadd.f32 0.0, %v972
      %974 = vdwg.mxu0
      %v975 = vadd.f32 %v838, %v928
      %v976 = vadd.f32 %v839, %v931
      %v977 = vadd.f32 %v840, %v934
      %v978 = vadd.f32 %v841, %v937
      %v979 = vadd.f32 %v842, %v940
      %v980 = vadd.f32 %v843, %v943
      %v981 = vadd.f32 %v844, %v946
      %v982 = vadd.f32 %v845, %v949
      %v983 = vadd.f32 %v846, %v952
      %v984 = vadd.f32 %v847, %v955
      %v985 = vadd.f32 %v848, %v958
      %v986 = vadd.f32 %v849, %v961
      %v987 = vadd.f32 %v850, %v964
      %v988 = vadd.f32 %v851, %v967
      %v989 = vadd.f32 %v852, %v970
      %v990 = vadd.f32 %v853, %v973
      %991 = vmatpush.msra.mxu0 %v990
      %992 = vmatpush.msra.mxu0 %v989
      %993 = vmatpush.msra.mxu0 %v988
      %994 = vmatpush.msra.mxu0 %v987
      %995 = vmatpush.msra.mxu0 %v986
      %996 = vmatpush.msra.mxu0 %v985
      %997 = vmatpush.msra.mxu0 %v984
      %998 = vmatpush.msra.mxu0 %v983
      %999 = vmatpush.msra.mxu0 %v982
      %1000 = vmatpush.msra.mxu0 %v981
      %1001 = vmatpush.msra.mxu0 %v980
      %1002 = vmatpush.msra.mxu0 %v979
      %1003 = vmatpush.msra.mxu0 %v978
      %1004 = vmatpush.msra.mxu0 %v977
      %1005 = vmatpush.msra.mxu0 %v976
      %1006 = vmatpush.msra.mxu0 %v975
      %1007 = vmatmul.f32.gmra.mxu0 %v358
      %v1008 = vpop.f32.mrf.mxu0
      %v1009 = vadd.f32 0.0, %v1008
      %1010 = vdwg.mxu0
      %v1011 = vmul.f32 %v975, %v975
      %v1012 = vmul.f32 %v976, %v976
      %v1013 = vmul.f32 %v977, %v977
      %v1014 = vmul.f32 %v978, %v978
      %v1015 = vmul.f32 %v979, %v979
      %v1016 = vmul.f32 %v980, %v980
      %v1017 = vmul.f32 %v981, %v981
      %v1018 = vmul.f32 %v982, %v982
      %v1019 = vmul.f32 %v983, %v983
      %v1020 = vmul.f32 %v984, %v984
      %v1021 = vmul.f32 %v985, %v985
      %v1022 = vmul.f32 %v986, %v986
      %v1023 = vmul.f32 %v987, %v987
      %v1024 = vmul.f32 %v988, %v988
      %v1025 = vmul.f32 %v989, %v989
      %v1026 = vmul.f32 %v990, %v990
      %1027 = vmatpush.msra.mxu0 %v1026
      %1028 = vmatpush.msra.mxu0 %v1025
      %1029 = vmatpush.msra.mxu0 %v1024
      %1030 = vmatpush.msra.mxu0 %v1023
      %1031 = vmatpush.msra.mxu0 %v1022
      %1032 = vmatpush.msra.mxu0 %v1021
      %1033 = vmatpush.msra.mxu0 %v1020
      %1034 = vmatpush.msra.mxu0 %v1019
      %1035 = vmatpush.msra.mxu0 %v1018
      %1036 = vmatpush.msra.mxu0 %v1017
      %1037 = vmatpush.msra.mxu0 %v1016
      %1038 = vmatpush.msra.mxu0 %v1015
      %1039 = vmatpush.msra.mxu0 %v1014
      %1040 = vmatpush.msra.mxu0 %v1013
      %1041 = vmatpush.msra.mxu0 %v1012
      %1042 = vmatpush.msra.mxu0 %v1011
      %1043 = vmatmul.f32.gmra.mxu0 %v358
      %v1044 = vpop.f32.mrf.mxu0
      %v1045 = vadd.f32 0.0, %v1044
      %1046 = vdwg.mxu0
      %1047 = vmatpush.msra.mxu0 %v390
      %1048 = vmatpush.msra.mxu0 %v389
      %1049 = vmatpush.msra.mxu0 %v388
      %1050 = vmatpush.msra.mxu0 %v387
      %1051 = vmatpush.msra.mxu0 %v386
      %1052 = vmatpush.msra.mxu0 %v385
      %1053 = vmatpush.msra.mxu0 %v384
      %1054 = vmatpush.msra.mxu0 %v383
      %1055 = vmatpush.msra.mxu0 %v382
      %1056 = vmatpush.msra.mxu0 %v381
      %1057 = vmatpush.msra.mxu0 %v380
      %1058 = vmatpush.msra.mxu0 %v379
      %1059 = vmatpush.msra.mxu0 %v378
      %1060 = vmatpush.msra.mxu0 %v377
      %1061 = vmatpush.msra.mxu0 %v376
      %1062 = vmatpush.msra.mxu0 %v375
      %1063 = vmatmul.f32.gmra.mxu0 %v1009
      %v1064 = vpop.f32.mrf.mxu0
      %v1065 = vadd.f32 0.0, %v1064
      %1066 = vdwg.mxu0
      %1067 = vmatpush.msra.mxu0 %v390
      %1068 = vmatpush.msra.mxu0 %v389
      %1069 = vmatpush.msra.mxu0 %v388
      %1070 = vmatpush.msra.mxu0 %v387
      %1071 = vmatpush.msra.mxu0 %v386
      %1072 = vmatpush.msra.mxu0 %v385
      %1073 = vmatpush.msra.mxu0 %v384
      %1074 = vmatpush.msra.mxu0 %v383
      %1075 = vmatpush.msra.mxu0 %v382
      %1076 = vmatpush.msra.mxu0 %v381
      %1077 = vmatpush.msra.mxu0 %v380
      %1078 = vmatpush.msra.mxu0 %v379
      %1079 = vmatpush.msra.mxu0 %v378
      %1080 = vmatpush.msra.mxu0 %v377
      %1081 = vmatpush.msra.mxu0 %v376
      %1082 = vmatpush.msra.mxu0 %v375
      %1083 = vmatmul.f32.gmra.mxu0 %v1045
      %v1084 = vpop.f32.mrf.mxu0
      %v1085 = vadd.f32 0.0, %v1084
      %1086 = vdwg.mxu0
      %v1087 = vmul.f32 %v1065, %v1065
      %v1088 = vsub.f32 %v1085, %v1087
      %v1089 = vmax.f32 %v1088, 0.0
      %v1090 = vadd.f32 %v1089, 1e-05
      %v1091 = vrsqrt.pop %v1090
      %v1092 = vmul.f32 %v1091, %v1090
      %v1093 = vmul.f32 %v1092, %v1091
      %v1094 = vmul.f32 0.5, %v1093
      %v1095 = vsub.f32 1.5, %v1094
      %v1096 = vmul.f32 %v1091, %v1095
      %vm1097 = vweird.f32 %v1090
      %vm1098 = vweird.f32 %v1091
      %vm1099 = vmor %vm1097, %vm1098
      %v1100 = vsel %vm1099, %v1091, %v1096
      %v1101 = vperm.slane %v391, 0
      %v1102 = vmul.f32 %v1100, %v1101
      %v1103 = vmul.f32 %v1065, %v1102
      %v1104 = vperm.slane %v391, 1
      %v1105 = vsub.f32 %v1104, %v1103
      %vm1106 = vcmask 64512
      %v1108 = vsel %vm1106, %v359, 0
      %v1111 = vsel %vm1106, %v360, 0
      %v1114 = vsel %vm1106, %v361, 0
      %v1117 = vsel %vm1106, %v362, 0
      %v1120 = vsel %vm1106, %v363, 0
      %v1123 = vsel %vm1106, %v364, 0
      %v1126 = vsel %vm1106, %v365, 0
      %v1129 = vsel %vm1106, %v366, 0
      %v1132 = vsel %vm1106, %v367, 0
      %v1135 = vsel %vm1106, %v368, 0
      %v1138 = vsel %vm1106, %v369, 0
      %v1141 = vsel %vm1106, %v370, 0
      %v1144 = vsel %vm1106, %v371, 0
      %v1147 = vsel %vm1106, %v372, 0
      %v1150 = vsel %vm1106, %v373, 0
      %v1153 = vsel %vm1106, %v374, 0
      %1155 = vmatpush.msra.mxu0 0.0
      %1156 = vmatpush.msra.mxu0 0.0
      %1157 = vmatpush.msra.mxu0 0.0
      %1158 = vmatpush.msra.mxu0 0.0
      %1159 = vmatpush.msra.mxu0 0.0
      %1160 = vmatpush.msra.mxu0 0.0
      %1161 = vmatpush.msra.mxu0 0.0
      %1162 = vmatpush.msra.mxu0 0.0
      %1163 = vmatpush.msra.mxu0 0.0
      %1164 = vmatpush.msra.mxu0 0.0
      %1165 = vmatpush.msra.mxu0 0.0
      %1166 = vmatpush.msra.mxu0 0.0
      %1167 = vmatpush.msra.mxu0 0.0
      %1168 = vmatpush.msra.mxu0 0.0
      %1169 = vmatpush.msra.mxu0 0.0
      %1170 = vmatpush.msra.mxu0 %v1102
      %1171 = vmatmul.f32.gmra.mxu0 %v1108
      %v1172 = vpop.f32.mrf.mxu0
      %v1173 = vadd.f32 0.0, %v1172
      %1174 = vmatmul.f32.gmra.mxu0 %v1111
      %v1175 = vpop.f32.mrf.mxu0
      %v1176 = vadd.f32 0.0, %v1175
      %1177 = vmatmul.f32.gmra.mxu0 %v1114
      %v1178 = vpop.f32.mrf.mxu0
      %v1179 = vadd.f32 0.0, %v1178
      %1180 = vmatmul.f32.gmra.mxu0 %v1117
      %v1181 = vpop.f32.mrf.mxu0
      %v1182 = vadd.f32 0.0, %v1181
      %1183 = vmatmul.f32.gmra.mxu0 %v1120
      %v1184 = vpop.f32.mrf.mxu0
      %v1185 = vadd.f32 0.0, %v1184
      %1186 = vmatmul.f32.gmra.mxu0 %v1123
      %v1187 = vpop.f32.mrf.mxu0
      %v1188 = vadd.f32 0.0, %v1187
      %1189 = vmatmul.f32.gmra.mxu0 %v1126
      %v1190 = vpop.f32.mrf.mxu0
      %v1191 = vadd.f32 0.0, %v1190
      %1192 = vmatmul.f32.gmra.mxu0 %v1129
      %v1193 = vpop.f32.mrf.mxu0
      %v1194 = vadd.f32 0.0, %v1193
      %1195 = vmatmul.f32.gmra.mxu0 %v1132
      %v1196 = vpop.f32.mrf.mxu0
      %v1197 = vadd.f32 0.0, %v1196
      %1198 = vmatmul.f32.gmra.mxu0 %v1135
      %v1199 = vpop.f32.mrf.mxu0
      %v1200 = vadd.f32 0.0, %v1199
      %1201 = vmatmul.f32.gmra.mxu0 %v1138
      %v1202 = vpop.f32.mrf.mxu0
      %v1203 = vadd.f32 0.0, %v1202
      %1204 = vmatmul.f32.gmra.mxu0 %v1141
      %v1205 = vpop.f32.mrf.mxu0
      %v1206 = vadd.f32 0.0, %v1205
      %1207 = vmatmul.f32.gmra.mxu0 %v1144
      %v1208 = vpop.f32.mrf.mxu0
      %v1209 = vadd.f32 0.0, %v1208
      %1210 = vmatmul.f32.gmra.mxu0 %v1147
      %v1211 = vpop.f32.mrf.mxu0
      %v1212 = vadd.f32 0.0, %v1211
      %1213 = vmatmul.f32.gmra.mxu0 %v1150
      %v1214 = vpop.f32.mrf.mxu0
      %v1215 = vadd.f32 0.0, %v1214
      %1216 = vmatmul.f32.gmra.mxu0 %v1153
      %v1217 = vpop.f32.mrf.mxu0
      %v1218 = vadd.f32 0.0, %v1217
      %1219 = vdwg.mxu0
      %1220 = vmatpush.msra.mxu0 0.0
      %1221 = vmatpush.msra.mxu0 0.0
      %1222 = vmatpush.msra.mxu0 0.0
      %1223 = vmatpush.msra.mxu0 0.0
      %1224 = vmatpush.msra.mxu0 0.0
      %1225 = vmatpush.msra.mxu0 0.0
      %1226 = vmatpush.msra.mxu0 0.0
      %1227 = vmatpush.msra.mxu0 0.0
      %1228 = vmatpush.msra.mxu0 0.0
      %1229 = vmatpush.msra.mxu0 0.0
      %1230 = vmatpush.msra.mxu0 0.0
      %1231 = vmatpush.msra.mxu0 0.0
      %1232 = vmatpush.msra.mxu0 0.0
      %1233 = vmatpush.msra.mxu0 0.0
      %1234 = vmatpush.msra.mxu0 0.0
      %1235 = vmatpush.msra.mxu0 %v1105
      %1236 = vmatmul.f32.gmra.mxu0 %v1108
      %v1237 = vpop.f32.mrf.mxu0
      %v1238 = vadd.f32 0.0, %v1237
      %1239 = vmatmul.f32.gmra.mxu0 %v1111
      %v1240 = vpop.f32.mrf.mxu0
      %v1241 = vadd.f32 0.0, %v1240
      %1242 = vmatmul.f32.gmra.mxu0 %v1114
      %v1243 = vpop.f32.mrf.mxu0
      %v1244 = vadd.f32 0.0, %v1243
      %1245 = vmatmul.f32.gmra.mxu0 %v1117
      %v1246 = vpop.f32.mrf.mxu0
      %v1247 = vadd.f32 0.0, %v1246
      %1248 = vmatmul.f32.gmra.mxu0 %v1120
      %v1249 = vpop.f32.mrf.mxu0
      %v1250 = vadd.f32 0.0, %v1249
      %1251 = vmatmul.f32.gmra.mxu0 %v1123
      %v1252 = vpop.f32.mrf.mxu0
      %v1253 = vadd.f32 0.0, %v1252
      %1254 = vmatmul.f32.gmra.mxu0 %v1126
      %v1255 = vpop.f32.mrf.mxu0
      %v1256 = vadd.f32 0.0, %v1255
      %1257 = vmatmul.f32.gmra.mxu0 %v1129
      %v1258 = vpop.f32.mrf.mxu0
      %v1259 = vadd.f32 0.0, %v1258
      %1260 = vmatmul.f32.gmra.mxu0 %v1132
      %v1261 = vpop.f32.mrf.mxu0
      %v1262 = vadd.f32 0.0, %v1261
      %1263 = vmatmul.f32.gmra.mxu0 %v1135
      %v1264 = vpop.f32.mrf.mxu0
      %v1265 = vadd.f32 0.0, %v1264
      %1266 = vmatmul.f32.gmra.mxu0 %v1138
      %v1267 = vpop.f32.mrf.mxu0
      %v1268 = vadd.f32 0.0, %v1267
      %1269 = vmatmul.f32.gmra.mxu0 %v1141
      %v1270 = vpop.f32.mrf.mxu0
      %v1271 = vadd.f32 0.0, %v1270
      %1272 = vmatmul.f32.gmra.mxu0 %v1144
      %v1273 = vpop.f32.mrf.mxu0
      %v1274 = vadd.f32 0.0, %v1273
      %1275 = vmatmul.f32.gmra.mxu0 %v1147
      %v1276 = vpop.f32.mrf.mxu0
      %v1277 = vadd.f32 0.0, %v1276
      %1278 = vmatmul.f32.gmra.mxu0 %v1150
      %v1279 = vpop.f32.mrf.mxu0
      %v1280 = vadd.f32 0.0, %v1279
      %1281 = vmatmul.f32.gmra.mxu0 %v1153
      %v1282 = vpop.f32.mrf.mxu0
      %v1283 = vadd.f32 0.0, %v1282
      %1284 = vdwg.mxu0
      %v1285 = vmul.f32 %v975, %v1173
      %v1286 = vmul.f32 %v976, %v1176
      %v1287 = vmul.f32 %v977, %v1179
      %v1288 = vmul.f32 %v978, %v1182
      %v1289 = vmul.f32 %v979, %v1185
      %v1290 = vmul.f32 %v980, %v1188
      %v1291 = vmul.f32 %v981, %v1191
      %v1292 = vmul.f32 %v982, %v1194
      %v1293 = vmul.f32 %v983, %v1197
      %v1294 = vmul.f32 %v984, %v1200
      %v1295 = vmul.f32 %v985, %v1203
      %v1296 = vmul.f32 %v986, %v1206
      %v1297 = vmul.f32 %v987, %v1209
      %v1298 = vmul.f32 %v988, %v1212
      %v1299 = vmul.f32 %v989, %v1215
      %v1300 = vmul.f32 %v990, %v1218
      %v1301 = vadd.f32 %v1285, %v1238
      %v1302 = vadd.f32 %v1286, %v1241
      %v1303 = vadd.f32 %v1287, %v1244
      %v1304 = vadd.f32 %v1288, %v1247
      %v1305 = vadd.f32 %v1289, %v1250
      %v1306 = vadd.f32 %v1290, %v1253
      %v1307 = vadd.f32 %v1291, %v1256
      %v1308 = vadd.f32 %v1292, %v1259
      %v1309 = vadd.f32 %v1293, %v1262
      %v1310 = vadd.f32 %v1294, %v1265
      %v1311 = vadd.f32 %v1295, %v1268
      %v1312 = vadd.f32 %v1296, %v1271
      %v1313 = vadd.f32 %v1297, %v1274
      %v1314 = vadd.f32 %v1298, %v1277
      %v1315 = vadd.f32 %v1299, %v1280
      %v1316 = vadd.f32 %v1300, %v1283
      %v1317 = vmax.f32 %v1301, 0.0
      %v1318 = vmax.f32 %v1302, 0.0
      %v1319 = vmax.f32 %v1303, 0.0
      %v1320 = vmax.f32 %v1304, 0.0
      %v1321 = vmax.f32 %v1305, 0.0
      %v1322 = vmax.f32 %v1306, 0.0
      %v1323 = vmax.f32 %v1307, 0.0
      %v1324 = vmax.f32 %v1308, 0.0
      %v1325 = vmax.f32 %v1309, 0.0
      %v1326 = vmax.f32 %v1310, 0.0
      %v1327 = vmax.f32 %v1311, 0.0
      %v1328 = vmax.f32 %v1312, 0.0
      %v1329 = vmax.f32 %v1313, 0.0
      %v1330 = vmax.f32 %v1314, 0.0
      %v1331 = vmax.f32 %v1315, 0.0
      %v1332 = vmax.f32 %v1316, 0.0
      %1333 = vmatpush.msra.mxu0 %v1332
      %1334 = vmatpush.msra.mxu0 %v1331
      %1335 = vmatpush.msra.mxu0 %v1330
      %1336 = vmatpush.msra.mxu0 %v1329
      %1337 = vmatpush.msra.mxu0 %v1328
      %1338 = vmatpush.msra.mxu0 %v1327
      %1339 = vmatpush.msra.mxu0 %v1326
      %1340 = vmatpush.msra.mxu0 %v1325
      %1341 = vmatpush.msra.mxu0 %v1324
      %1342 = vmatpush.msra.mxu0 %v1323
      %1343 = vmatpush.msra.mxu0 %v1322
      %1344 = vmatpush.msra.mxu0 %v1321
      %1345 = vmatpush.msra.mxu0 %v1320
      %1346 = vmatpush.msra.mxu0 %v1319
      %1347 = vmatpush.msra.mxu0 %v1318
      %1348 = vmatpush.msra.mxu0 %v1317
      %1349 = vmatmul.f32.gmra.mxu0 %v325
      %v1350 = vpop.f32.mrf.mxu0
      %v1351 = vadd.f32 0.0, %v1350
      %1352 = vmatmul.f32.gmra.mxu0 %v326
      %v1353 = vpop.f32.mrf.mxu0
      %v1354 = vadd.f32 0.0, %v1353
      %1355 = vmatmul.f32.gmra.mxu0 %v327
      %v1356 = vpop.f32.mrf.mxu0
      %v1357 = vadd.f32 0.0, %v1356
      %1358 = vmatmul.f32.gmra.mxu0 %v328
      %v1359 = vpop.f32.mrf.mxu0
      %v1360 = vadd.f32 0.0, %v1359
      %1361 = vmatmul.f32.gmra.mxu0 %v329
      %v1362 = vpop.f32.mrf.mxu0
      %v1363 = vadd.f32 0.0, %v1362
      %1364 = vmatmul.f32.gmra.mxu0 %v330
      %v1365 = vpop.f32.mrf.mxu0
      %v1366 = vadd.f32 0.0, %v1365
      %1367 = vmatmul.f32.gmra.mxu0 %v331
      %v1368 = vpop.f32.mrf.mxu0
      %v1369 = vadd.f32 0.0, %v1368
      %1370 = vmatmul.f32.gmra.mxu0 %v332
      %v1371 = vpop.f32.mrf.mxu0
      %v1372 = vadd.f32 0.0, %v1371
      %1373 = vmatmul.f32.gmra.mxu0 %v333
      %v1374 = vpop.f32.mrf.mxu0
      %v1375 = vadd.f32 0.0, %v1374
      %1376 = vmatmul.f32.gmra.mxu0 %v334
      %v1377 = vpop.f32.mrf.mxu0
      %v1378 = vadd.f32 0.0, %v1377
      %1379 = vmatmul.f32.gmra.mxu0 %v335
      %v1380 = vpop.f32.mrf.mxu0
      %v1381 = vadd.f32 0.0, %v1380
      %1382 = vmatmul.f32.gmra.mxu0 %v336
      %v1383 = vpop.f32.mrf.mxu0
      %v1384 = vadd.f32 0.0, %v1383
      %1385 = vmatmul.f32.gmra.mxu0 %v337
      %v1386 = vpop.f32.mrf.mxu0
      %v1387 = vadd.f32 0.0, %v1386
      %1388 = vmatmul.f32.gmra.mxu0 %v338
      %v1389 = vpop.f32.mrf.mxu0
      %v1390 = vadd.f32 0.0, %v1389
      %1391 = vmatmul.f32.gmra.mxu0 %v339
      %v1392 = vpop.f32.mrf.mxu0
      %v1393 = vadd.f32 0.0, %v1392
      %1394 = vmatmul.f32.gmra.mxu0 %v340
      %v1395 = vpop.f32.mrf.mxu0
      %v1396 = vadd.f32 0.0, %v1395
      %1397 = vdwg.mxu0
      %1398 = vmatpush.msra.mxu0 %v1332
      %1399 = vmatpush.msra.mxu0 %v1331
      %1400 = vmatpush.msra.mxu0 %v1330
      %1401 = vmatpush.msra.mxu0 %v1329
      %1402 = vmatpush.msra.mxu0 %v1328
      %1403 = vmatpush.msra.mxu0 %v1327
      %1404 = vmatpush.msra.mxu0 %v1326
      %1405 = vmatpush.msra.mxu0 %v1325
      %1406 = vmatpush.msra.mxu0 %v1324
      %1407 = vmatpush.msra.mxu0 %v1323
      %1408 = vmatpush.msra.mxu0 %v1322
      %1409 = vmatpush.msra.mxu0 %v1321
      %1410 = vmatpush.msra.mxu0 %v1320
      %1411 = vmatpush.msra.mxu0 %v1319
      %1412 = vmatpush.msra.mxu0 %v1318
      %1413 = vmatpush.msra.mxu0 %v1317
      %1414 = vmatmul.f32.gmra.mxu0 %v342
      %v1415 = vpop.f32.mrf.mxu0
      %v1416 = vadd.f32 0.0, %v1415
      %1417 = vmatmul.f32.gmra.mxu0 %v343
      %v1418 = vpop.f32.mrf.mxu0
      %v1419 = vadd.f32 0.0, %v1418
      %1420 = vmatmul.f32.gmra.mxu0 %v344
      %v1421 = vpop.f32.mrf.mxu0
      %v1422 = vadd.f32 0.0, %v1421
      %1423 = vmatmul.f32.gmra.mxu0 %v345
      %v1424 = vpop.f32.mrf.mxu0
      %v1425 = vadd.f32 0.0, %v1424
      %1426 = vmatmul.f32.gmra.mxu0 %v346
      %v1427 = vpop.f32.mrf.mxu0
      %v1428 = vadd.f32 0.0, %v1427
      %1429 = vmatmul.f32.gmra.mxu0 %v347
      %v1430 = vpop.f32.mrf.mxu0
      %v1431 = vadd.f32 0.0, %v1430
      %1432 = vmatmul.f32.gmra.mxu0 %v348
      %v1433 = vpop.f32.mrf.mxu0
      %v1434 = vadd.f32 0.0, %v1433
      %1435 = vmatmul.f32.gmra.mxu0 %v349
      %v1436 = vpop.f32.mrf.mxu0
      %v1437 = vadd.f32 0.0, %v1436
      %1438 = vmatmul.f32.gmra.mxu0 %v350
      %v1439 = vpop.f32.mrf.mxu0
      %v1440 = vadd.f32 0.0, %v1439
      %1441 = vmatmul.f32.gmra.mxu0 %v351
      %v1442 = vpop.f32.mrf.mxu0
      %v1443 = vadd.f32 0.0, %v1442
      %1444 = vmatmul.f32.gmra.mxu0 %v352
      %v1445 = vpop.f32.mrf.mxu0
      %v1446 = vadd.f32 0.0, %v1445
      %1447 = vmatmul.f32.gmra.mxu0 %v353
      %v1448 = vpop.f32.mrf.mxu0
      %v1449 = vadd.f32 0.0, %v1448
      %1450 = vmatmul.f32.gmra.mxu0 %v354
      %v1451 = vpop.f32.mrf.mxu0
      %v1452 = vadd.f32 0.0, %v1451
      %1453 = vmatmul.f32.gmra.mxu0 %v355
      %v1454 = vpop.f32.mrf.mxu0
      %v1455 = vadd.f32 0.0, %v1454
      %1456 = vmatmul.f32.gmra.mxu0 %v356
      %v1457 = vpop.f32.mrf.mxu0
      %v1458 = vadd.f32 0.0, %v1457
      %1459 = vmatmul.f32.gmra.mxu0 %v357
      %v1460 = vpop.f32.mrf.mxu0
      %v1461 = vadd.f32 0.0, %v1460
      %1462 = vdwg.mxu0
      %v1463 = vld [vmem:[%s3 + $0x8] sm:$0xff]
      %v1464 = vld [vmem:[%s3 + $0x20] sm:$0xff]
      %v1465 = vld [vmem:[%s3 + $0x38] sm:$0xff]
      %v1466 = vld [vmem:[%s3 + $0x50] sm:$0xff]
      %v1467 = vld [vmem:[%s3 + $0x68] sm:$0xff]
      %v1468 = vld [vmem:[%s3 + $0x80] sm:$0xff]
      %v1469 = vld [vmem:[%s3 + $0x98] sm:$0xff]
      %v1470 = vld [vmem:[%s3 + $0xb0] sm:$0xff]
      %v1471 = vld [vmem:[%s3 + $0xc8] sm:$0xff]
      %v1472 = vld [vmem:[%s3 + $0xe0] sm:$0xff]
      %v1473 = vld [vmem:[%s3 + $0xf8] sm:$0xff]
      %v1474 = vld [vmem:[%s3 + $0x110] sm:$0xff]
      %v1475 = vld [vmem:[%s3 + $0x128] sm:$0xff]
      %v1476 = vld [vmem:[%s3 + $0x140] sm:$0xff]
      %v1477 = vld [vmem:[%s3 + $0x158] sm:$0xff]
      %v1478 = vld [vmem:[%s3 + $0x170] sm:$0xff]
      %v1479 = vld [vmem:[%s3] sm:$0xff]
      %v1480 = vld [vmem:[%s3 + $0x18] sm:$0xff]
      %v1481 = vld [vmem:[%s3 + $0x30] sm:$0xff]
      %v1482 = vld [vmem:[%s3 + $0x48] sm:$0xff]
      %v1483 = vld [vmem:[%s3 + $0x60] sm:$0xff]
      %v1484 = vld [vmem:[%s3 + $0x78] sm:$0xff]
      %v1485 = vld [vmem:[%s3 + $0x90] sm:$0xff]
      %v1486 = vld [vmem:[%s3 + $0xa8] sm:$0xff]
      %v1487 = vld [vmem:[%s3 + $0xc0] sm:$0xff]
      %v1488 = vld [vmem:[%s3 + $0xd8] sm:$0xff]
      %v1489 = vld [vmem:[%s3 + $0xf0] sm:$0xff]
      %v1490 = vld [vmem:[%s3 + $0x108] sm:$0xff]
      %v1491 = vld [vmem:[%s3 + $0x120] sm:$0xff]
      %v1492 = vld [vmem:[%s3 + $0x138] sm:$0xff]
      %v1493 = vld [vmem:[%s3 + $0x150] sm:$0xff]
      %v1494 = vld [vmem:[%s3 + $0x168] sm:$0xff]
      %1495 = vmatpush.msra.mxu0 %v1494
      %1496 = vmatpush.msra.mxu0 %v1493
      %1497 = vmatpush.msra.mxu0 %v1492
      %1498 = vmatpush.msra.mxu0 %v1491
      %1499 = vmatpush.msra.mxu0 %v1490
      %1500 = vmatpush.msra.mxu0 %v1489
      %1501 = vmatpush.msra.mxu0 %v1488
      %1502 = vmatpush.msra.mxu0 %v1487
      %1503 = vmatpush.msra.mxu0 %v1486
      %1504 = vmatpush.msra.mxu0 %v1485
      %1505 = vmatpush.msra.mxu0 %v1484
      %1506 = vmatpush.msra.mxu0 %v1483
      %1507 = vmatpush.msra.mxu0 %v1482
      %1508 = vmatpush.msra.mxu0 %v1481
      %1509 = vmatpush.msra.mxu0 %v1480
      %1510 = vmatpush.msra.mxu0 %v1479
      %1511 = vmatmul.f32.gmra.mxu0 %v1351
      %v1512 = vpop.f32.mrf.mxu0
      %v1513 = vadd.f32 0.0, %v1512
      %1514 = vmatmul.f32.gmra.mxu0 %v1354
      %v1515 = vpop.f32.mrf.mxu0
      %v1516 = vadd.f32 0.0, %v1515
      %1517 = vmatmul.f32.gmra.mxu0 %v1357
      %v1518 = vpop.f32.mrf.mxu0
      %v1519 = vadd.f32 0.0, %v1518
      %1520 = vmatmul.f32.gmra.mxu0 %v1360
      %v1521 = vpop.f32.mrf.mxu0
      %v1522 = vadd.f32 0.0, %v1521
      %1523 = vmatmul.f32.gmra.mxu0 %v1363
      %v1524 = vpop.f32.mrf.mxu0
      %v1525 = vadd.f32 0.0, %v1524
      %1526 = vmatmul.f32.gmra.mxu0 %v1366
      %v1527 = vpop.f32.mrf.mxu0
      %v1528 = vadd.f32 0.0, %v1527
      %1529 = vmatmul.f32.gmra.mxu0 %v1369
      %v1530 = vpop.f32.mrf.mxu0
      %v1531 = vadd.f32 0.0, %v1530
      %1532 = vmatmul.f32.gmra.mxu0 %v1372
      %v1533 = vpop.f32.mrf.mxu0
      %v1534 = vadd.f32 0.0, %v1533
      %1535 = vmatmul.f32.gmra.mxu0 %v1375
      %v1536 = vpop.f32.mrf.mxu0
      %v1537 = vadd.f32 0.0, %v1536
      %1538 = vmatmul.f32.gmra.mxu0 %v1378
      %v1539 = vpop.f32.mrf.mxu0
      %v1540 = vadd.f32 0.0, %v1539
      %1541 = vmatmul.f32.gmra.mxu0 %v1381
      %v1542 = vpop.f32.mrf.mxu0
      %v1543 = vadd.f32 0.0, %v1542
      %1544 = vmatmul.f32.gmra.mxu0 %v1384
      %v1545 = vpop.f32.mrf.mxu0
      %v1546 = vadd.f32 0.0, %v1545
      %1547 = vmatmul.f32.gmra.mxu0 %v1387
      %v1548 = vpop.f32.mrf.mxu0
      %v1549 = vadd.f32 0.0, %v1548
      %1550 = vmatmul.f32.gmra.mxu0 %v1390
      %v1551 = vpop.f32.mrf.mxu0
      %v1552 = vadd.f32 0.0, %v1551
      %1553 = vmatmul.f32.gmra.mxu0 %v1393
      %v1554 = vpop.f32.mrf.mxu0
      %v1555 = vadd.f32 0.0, %v1554
      %1556 = vmatmul.f32.gmra.mxu0 %v1396
      %v1557 = vpop.f32.mrf.mxu0
      %v1558 = vadd.f32 0.0, %v1557
      %1559 = vdwg.mxu0
      %1560 = vmatpush.msra.mxu0 %v1478
      %1561 = vmatpush.msra.mxu0 %v1477
      %1562 = vmatpush.msra.mxu0 %v1476
      %1563 = vmatpush.msra.mxu0 %v1475
      %1564 = vmatpush.msra.mxu0 %v1474
      %1565 = vmatpush.msra.mxu0 %v1473
      %1566 = vmatpush.msra.mxu0 %v1472
      %1567 = vmatpush.msra.mxu0 %v1471
      %1568 = vmatpush.msra.mxu0 %v1470
      %1569 = vmatpush.msra.mxu0 %v1469
      %1570 = vmatpush.msra.mxu0 %v1468
      %1571 = vmatpush.msra.mxu0 %v1467
      %1572 = vmatpush.msra.mxu0 %v1466
      %1573 = vmatpush.msra.mxu0 %v1465
      %1574 = vmatpush.msra.mxu0 %v1464
      %1575 = vmatpush.msra.mxu0 %v1463
      %1576 = vmatmul.f32.gmra.mxu0 %v1317
      %v1577 = vpop.f32.mrf.mxu0
      %v1578 = vadd.f32 %v1513, %v1577
      %1579 = vmatmul.f32.gmra.mxu0 %v1318
      %v1580 = vpop.f32.mrf.mxu0
      %v1581 = vadd.f32 %v1516, %v1580
      %1582 = vmatmul.f32.gmra.mxu0 %v1319
      %v1583 = vpop.f32.mrf.mxu0
      %v1584 = vadd.f32 %v1519, %v1583
      %1585 = vmatmul.f32.gmra.mxu0 %v1320
      %v1586 = vpop.f32.mrf.mxu0
      %v1587 = vadd.f32 %v1522, %v1586
      %1588 = vmatmul.f32.gmra.mxu0 %v1321
      %v1589 = vpop.f32.mrf.mxu0
      %v1590 = vadd.f32 %v1525, %v1589
      %1591 = vmatmul.f32.gmra.mxu0 %v1322
      %v1592 = vpop.f32.mrf.mxu0
      %v1593 = vadd.f32 %v1528, %v1592
      %1594 = vmatmul.f32.gmra.mxu0 %v1323
      %v1595 = vpop.f32.mrf.mxu0
      %v1596 = vadd.f32 %v1531, %v1595
      %1597 = vmatmul.f32.gmra.mxu0 %v1324
      %v1598 = vpop.f32.mrf.mxu0
      %v1599 = vadd.f32 %v1534, %v1598
      %1600 = vmatmul.f32.gmra.mxu0 %v1325
      %v1601 = vpop.f32.mrf.mxu0
      %v1602 = vadd.f32 %v1537, %v1601
      %1603 = vmatmul.f32.gmra.mxu0 %v1326
      %v1604 = vpop.f32.mrf.mxu0
      %v1605 = vadd.f32 %v1540, %v1604
      %1606 = vmatmul.f32.gmra.mxu0 %v1327
      %v1607 = vpop.f32.mrf.mxu0
      %v1608 = vadd.f32 %v1543, %v1607
      %1609 = vmatmul.f32.gmra.mxu0 %v1328
      %v1610 = vpop.f32.mrf.mxu0
      %v1611 = vadd.f32 %v1546, %v1610
      %1612 = vmatmul.f32.gmra.mxu0 %v1329
      %v1613 = vpop.f32.mrf.mxu0
      %v1614 = vadd.f32 %v1549, %v1613
      %1615 = vmatmul.f32.gmra.mxu0 %v1330
      %v1616 = vpop.f32.mrf.mxu0
      %v1617 = vadd.f32 %v1552, %v1616
      %1618 = vmatmul.f32.gmra.mxu0 %v1331
      %v1619 = vpop.f32.mrf.mxu0
      %v1620 = vadd.f32 %v1555, %v1619
      %1621 = vmatmul.f32.gmra.mxu0 %v1332
      %v1622 = vpop.f32.mrf.mxu0
      %v1623 = vadd.f32 %v1558, %v1622
      %1624 = vdwg.mxu0
      %v1625 = vld [vmem:[%s3 + $0x10] sm:$0xff]
      %v1626 = vld [vmem:[%s3 + $0x28] sm:$0xff]
      %v1627 = vld [vmem:[%s3 + $0x40] sm:$0xff]
      %v1628 = vld [vmem:[%s3 + $0x58] sm:$0xff]
      %v1629 = vld [vmem:[%s3 + $0x70] sm:$0xff]
      %v1630 = vld [vmem:[%s3 + $0x88] sm:$0xff]
      %v1631 = vld [vmem:[%s3 + $0xa0] sm:$0xff]
      %v1632 = vld [vmem:[%s3 + $0xb8] sm:$0xff]
      %v1633 = vld [vmem:[%s3 + $0xd0] sm:$0xff]
      %v1634 = vld [vmem:[%s3 + $0xe8] sm:$0xff]
      %v1635 = vld [vmem:[%s3 + $0x100] sm:$0xff]
      %v1636 = vld [vmem:[%s3 + $0x118] sm:$0xff]
      %v1637 = vld [vmem:[%s3 + $0x130] sm:$0xff]
      %v1638 = vld [vmem:[%s3 + $0x148] sm:$0xff]
      %v1639 = vld [vmem:[%s3 + $0x160] sm:$0xff]
      %v1640 = vld [vmem:[%s3 + $0x178] sm:$0xff]
      %1641 = vmatpush.msra.mxu0 %v1640
      %1642 = vmatpush.msra.mxu0 %v1639
      %1643 = vmatpush.msra.mxu0 %v1638
      %1644 = vmatpush.msra.mxu0 %v1637
      %1645 = vmatpush.msra.mxu0 %v1636
      %1646 = vmatpush.msra.mxu0 %v1635
      %1647 = vmatpush.msra.mxu0 %v1634
      %1648 = vmatpush.msra.mxu0 %v1633
      %1649 = vmatpush.msra.mxu0 %v1632
      %1650 = vmatpush.msra.mxu0 %v1631
      %1651 = vmatpush.msra.mxu0 %v1630
      %1652 = vmatpush.msra.mxu0 %v1629
      %1653 = vmatpush.msra.mxu0 %v1628
      %1654 = vmatpush.msra.mxu0 %v1627
      %1655 = vmatpush.msra.mxu0 %v1626
      %1656 = vmatpush.msra.mxu0 %v1625
      %1657 = vmatmul.f32.gmra.mxu0 %v1416
      %v1658 = vpop.f32.mrf.mxu0
      %v1659 = vadd.f32 0.0, %v1658
      %1660 = vmatmul.f32.gmra.mxu0 %v1419
      %v1661 = vpop.f32.mrf.mxu0
      %v1662 = vadd.f32 0.0, %v1661
      %1663 = vmatmul.f32.gmra.mxu0 %v1422
      %v1664 = vpop.f32.mrf.mxu0
      %v1665 = vadd.f32 0.0, %v1664
      %1666 = vmatmul.f32.gmra.mxu0 %v1425
      %v1667 = vpop.f32.mrf.mxu0
      %v1668 = vadd.f32 0.0, %v1667
      %1669 = vmatmul.f32.gmra.mxu0 %v1428
      %v1670 = vpop.f32.mrf.mxu0
      %v1671 = vadd.f32 0.0, %v1670
      %1672 = vmatmul.f32.gmra.mxu0 %v1431
      %v1673 = vpop.f32.mrf.mxu0
      %v1674 = vadd.f32 0.0, %v1673
      %1675 = vmatmul.f32.gmra.mxu0 %v1434
      %v1676 = vpop.f32.mrf.mxu0
      %v1677 = vadd.f32 0.0, %v1676
      %1678 = vmatmul.f32.gmra.mxu0 %v1437
      %v1679 = vpop.f32.mrf.mxu0
      %v1680 = vadd.f32 0.0, %v1679
      %1681 = vmatmul.f32.gmra.mxu0 %v1440
      %v1682 = vpop.f32.mrf.mxu0
      %v1683 = vadd.f32 0.0, %v1682
      %1684 = vmatmul.f32.gmra.mxu0 %v1443
      %v1685 = vpop.f32.mrf.mxu0
      %v1686 = vadd.f32 0.0, %v1685
      %1687 = vmatmul.f32.gmra.mxu0 %v1446
      %v1688 = vpop.f32.mrf.mxu0
      %v1689 = vadd.f32 0.0, %v1688
      %1690 = vmatmul.f32.gmra.mxu0 %v1449
      %v1691 = vpop.f32.mrf.mxu0
      %v1692 = vadd.f32 0.0, %v1691
      %1693 = vmatmul.f32.gmra.mxu0 %v1452
      %v1694 = vpop.f32.mrf.mxu0
      %v1695 = vadd.f32 0.0, %v1694
      %1696 = vmatmul.f32.gmra.mxu0 %v1455
      %v1697 = vpop.f32.mrf.mxu0
      %v1698 = vadd.f32 0.0, %v1697
      %1699 = vmatmul.f32.gmra.mxu0 %v1458
      %v1700 = vpop.f32.mrf.mxu0
      %v1701 = vadd.f32 0.0, %v1700
      %1702 = vmatmul.f32.gmra.mxu0 %v1461
      %v1703 = vpop.f32.mrf.mxu0
      %v1704 = vadd.f32 0.0, %v1703
      %1705 = vdwg.mxu0
      %v1706 = vadd.f32 %v1578, %v1659
      %v1707 = vadd.f32 %v1581, %v1662
      %v1708 = vadd.f32 %v1584, %v1665
      %v1709 = vadd.f32 %v1587, %v1668
      %v1710 = vadd.f32 %v1590, %v1671
      %v1711 = vadd.f32 %v1593, %v1674
      %v1712 = vadd.f32 %v1596, %v1677
      %v1713 = vadd.f32 %v1599, %v1680
      %v1714 = vadd.f32 %v1602, %v1683
      %v1715 = vadd.f32 %v1605, %v1686
      %v1716 = vadd.f32 %v1608, %v1689
      %v1717 = vadd.f32 %v1611, %v1692
      %v1718 = vadd.f32 %v1614, %v1695
      %v1719 = vadd.f32 %v1617, %v1698
      %v1720 = vadd.f32 %v1620, %v1701
      %v1721 = vadd.f32 %v1623, %v1704
      %1722 = vmatpush.msra.mxu0 %v1721
      %1723 = vmatpush.msra.mxu0 %v1720
      %1724 = vmatpush.msra.mxu0 %v1719
      %1725 = vmatpush.msra.mxu0 %v1718
      %1726 = vmatpush.msra.mxu0 %v1717
      %1727 = vmatpush.msra.mxu0 %v1716
      %1728 = vmatpush.msra.mxu0 %v1715
      %1729 = vmatpush.msra.mxu0 %v1714
      %1730 = vmatpush.msra.mxu0 %v1713
      %1731 = vmatpush.msra.mxu0 %v1712
      %1732 = vmatpush.msra.mxu0 %v1711
      %1733 = vmatpush.msra.mxu0 %v1710
      %1734 = vmatpush.msra.mxu0 %v1709
      %1735 = vmatpush.msra.mxu0 %v1708
      %1736 = vmatpush.msra.mxu0 %v1707
      %1737 = vmatpush.msra.mxu0 %v1706
      %1738 = vmatmul.f32.gmra.mxu0 %v358
      %v1739 = vpop.f32.mrf.mxu0
      %v1740 = vadd.f32 0.0, %v1739
      %1741 = vdwg.mxu0
      %v1742 = vmul.f32 %v1706, %v1706
      %v1743 = vmul.f32 %v1707, %v1707
      %v1744 = vmul.f32 %v1708, %v1708
      %v1745 = vmul.f32 %v1709, %v1709
      %v1746 = vmul.f32 %v1710, %v1710
      %v1747 = vmul.f32 %v1711, %v1711
      %v1748 = vmul.f32 %v1712, %v1712
      %v1749 = vmul.f32 %v1713, %v1713
      %v1750 = vmul.f32 %v1714, %v1714
      %v1751 = vmul.f32 %v1715, %v1715
      %v1752 = vmul.f32 %v1716, %v1716
      %v1753 = vmul.f32 %v1717, %v1717
      %v1754 = vmul.f32 %v1718, %v1718
      %v1755 = vmul.f32 %v1719, %v1719
      %v1756 = vmul.f32 %v1720, %v1720
      %v1757 = vmul.f32 %v1721, %v1721
      %1758 = vmatpush.msra.mxu0 %v1757
      %1759 = vmatpush.msra.mxu0 %v1756
      %1760 = vmatpush.msra.mxu0 %v1755
      %1761 = vmatpush.msra.mxu0 %v1754
      %1762 = vmatpush.msra.mxu0 %v1753
      %1763 = vmatpush.msra.mxu0 %v1752
      %1764 = vmatpush.msra.mxu0 %v1751
      %1765 = vmatpush.msra.mxu0 %v1750
      %1766 = vmatpush.msra.mxu0 %v1749
      %1767 = vmatpush.msra.mxu0 %v1748
      %1768 = vmatpush.msra.mxu0 %v1747
      %1769 = vmatpush.msra.mxu0 %v1746
      %1770 = vmatpush.msra.mxu0 %v1745
      %1771 = vmatpush.msra.mxu0 %v1744
      %1772 = vmatpush.msra.mxu0 %v1743
      %1773 = vmatpush.msra.mxu0 %v1742
      %1774 = vmatmul.f32.gmra.mxu0 %v358
      %v1775 = vpop.f32.mrf.mxu0
      %v1776 = vadd.f32 0.0, %v1775
      %1777 = vdwg.mxu0
      %1778 = vmatpush.msra.mxu0 %v390
      %1779 = vmatpush.msra.mxu0 %v389
      %1780 = vmatpush.msra.mxu0 %v388
      %1781 = vmatpush.msra.mxu0 %v387
      %1782 = vmatpush.msra.mxu0 %v386
      %1783 = vmatpush.msra.mxu0 %v385
      %1784 = vmatpush.msra.mxu0 %v384
      %1785 = vmatpush.msra.mxu0 %v383
      %1786 = vmatpush.msra.mxu0 %v382
      %1787 = vmatpush.msra.mxu0 %v381
      %1788 = vmatpush.msra.mxu0 %v380
      %1789 = vmatpush.msra.mxu0 %v379
      %1790 = vmatpush.msra.mxu0 %v378
      %1791 = vmatpush.msra.mxu0 %v377
      %1792 = vmatpush.msra.mxu0 %v376
      %1793 = vmatpush.msra.mxu0 %v375
      %1794 = vmatmul.f32.gmra.mxu0 %v1740
      %v1795 = vpop.f32.mrf.mxu0
      %v1796 = vadd.f32 0.0, %v1795
      %1797 = vdwg.mxu0
      %1798 = vmatpush.msra.mxu0 %v390
      %1799 = vmatpush.msra.mxu0 %v389
      %1800 = vmatpush.msra.mxu0 %v388
      %1801 = vmatpush.msra.mxu0 %v387
      %1802 = vmatpush.msra.mxu0 %v386
      %1803 = vmatpush.msra.mxu0 %v385
      %1804 = vmatpush.msra.mxu0 %v384
      %1805 = vmatpush.msra.mxu0 %v383
      %1806 = vmatpush.msra.mxu0 %v382
      %1807 = vmatpush.msra.mxu0 %v381
      %1808 = vmatpush.msra.mxu0 %v380
      %1809 = vmatpush.msra.mxu0 %v379
      %1810 = vmatpush.msra.mxu0 %v378
      %1811 = vmatpush.msra.mxu0 %v377
      %1812 = vmatpush.msra.mxu0 %v376
      %1813 = vmatpush.msra.mxu0 %v375
      %1814 = vmatmul.f32.gmra.mxu0 %v1776
      %v1815 = vpop.f32.mrf.mxu0
      %v1816 = vadd.f32 0.0, %v1815
      %1817 = vdwg.mxu0
      %v1818 = vmul.f32 %v1796, %v1796
      %v1819 = vsub.f32 %v1816, %v1818
      %v1820 = vmax.f32 %v1819, 0.0
      %v1821 = vadd.f32 %v1820, 1e-05
      %v1822 = vrsqrt.pop %v1821
      %v1823 = vmul.f32 %v1822, %v1821
      %v1824 = vmul.f32 %v1823, %v1822
      %v1825 = vmul.f32 0.5, %v1824
      %v1826 = vsub.f32 1.5, %v1825
      %v1827 = vmul.f32 %v1822, %v1826
      %vm1828 = vweird.f32 %v1821
      %vm1829 = vweird.f32 %v1822
      %vm1830 = vmor %vm1828, %vm1829
      %v1831 = vsel %vm1830, %v1822, %v1827
      %v1832 = vperm.slane %v391, 2
      %v1833 = vmul.f32 %v1831, %v1832
      %v1834 = vmul.f32 %v1796, %v1833
      %v1835 = vperm.slane %v391, 3
      %v1836 = vsub.f32 %v1835, %v1834
      %1837 = vmatpush.msra.mxu0 0.0
      %1838 = vmatpush.msra.mxu0 0.0
      %1839 = vmatpush.msra.mxu0 0.0
      %1840 = vmatpush.msra.mxu0 0.0
      %1841 = vmatpush.msra.mxu0 0.0
      %1842 = vmatpush.msra.mxu0 0.0
      %1843 = vmatpush.msra.mxu0 0.0
      %1844 = vmatpush.msra.mxu0 0.0
      %1845 = vmatpush.msra.mxu0 0.0
      %1846 = vmatpush.msra.mxu0 0.0
      %1847 = vmatpush.msra.mxu0 0.0
      %1848 = vmatpush.msra.mxu0 0.0
      %1849 = vmatpush.msra.mxu0 0.0
      %1850 = vmatpush.msra.mxu0 0.0
      %1851 = vmatpush.msra.mxu0 0.0
      %1852 = vmatpush.msra.mxu0 %v1833
      %1853 = vmatmul.f32.gmra.mxu0 %v1108
      %v1854 = vpop.f32.mrf.mxu0
      %v1855 = vadd.f32 0.0, %v1854
      %1856 = vmatmul.f32.gmra.mxu0 %v1111
      %v1857 = vpop.f32.mrf.mxu0
      %v1858 = vadd.f32 0.0, %v1857
      %1859 = vmatmul.f32.gmra.mxu0 %v1114
      %v1860 = vpop.f32.mrf.mxu0
      %v1861 = vadd.f32 0.0, %v1860
      %1862 = vmatmul.f32.gmra.mxu0 %v1117
      %v1863 = vpop.f32.mrf.mxu0
      %v1864 = vadd.f32 0.0, %v1863
      %1865 = vmatmul.f32.gmra.mxu0 %v1120
      %v1866 = vpop.f32.mrf.mxu0
      %v1867 = vadd.f32 0.0, %v1866
      %1868 = vmatmul.f32.gmra.mxu0 %v1123
      %v1869 = vpop.f32.mrf.mxu0
      %v1870 = vadd.f32 0.0, %v1869
      %1871 = vmatmul.f32.gmra.mxu0 %v1126
      %v1872 = vpop.f32.mrf.mxu0
      %v1873 = vadd.f32 0.0, %v1872
      %1874 = vmatmul.f32.gmra.mxu0 %v1129
      %v1875 = vpop.f32.mrf.mxu0
      %v1876 = vadd.f32 0.0, %v1875
      %1877 = vmatmul.f32.gmra.mxu0 %v1132
      %v1878 = vpop.f32.mrf.mxu0
      %v1879 = vadd.f32 0.0, %v1878
      %1880 = vmatmul.f32.gmra.mxu0 %v1135
      %v1881 = vpop.f32.mrf.mxu0
      %v1882 = vadd.f32 0.0, %v1881
      %1883 = vmatmul.f32.gmra.mxu0 %v1138
      %v1884 = vpop.f32.mrf.mxu0
      %v1885 = vadd.f32 0.0, %v1884
      %1886 = vmatmul.f32.gmra.mxu0 %v1141
      %v1887 = vpop.f32.mrf.mxu0
      %v1888 = vadd.f32 0.0, %v1887
      %1889 = vmatmul.f32.gmra.mxu0 %v1144
      %v1890 = vpop.f32.mrf.mxu0
      %v1891 = vadd.f32 0.0, %v1890
      %1892 = vmatmul.f32.gmra.mxu0 %v1147
      %v1893 = vpop.f32.mrf.mxu0
      %v1894 = vadd.f32 0.0, %v1893
      %1895 = vmatmul.f32.gmra.mxu0 %v1150
      %v1896 = vpop.f32.mrf.mxu0
      %v1897 = vadd.f32 0.0, %v1896
      %1898 = vmatmul.f32.gmra.mxu0 %v1153
      %v1899 = vpop.f32.mrf.mxu0
      %v1900 = vadd.f32 0.0, %v1899
      %1901 = vdwg.mxu0
      %1902 = vmatpush.msra.mxu0 0.0
      %1903 = vmatpush.msra.mxu0 0.0
      %1904 = vmatpush.msra.mxu0 0.0
      %1905 = vmatpush.msra.mxu0 0.0
      %1906 = vmatpush.msra.mxu0 0.0
      %1907 = vmatpush.msra.mxu0 0.0
      %1908 = vmatpush.msra.mxu0 0.0
      %1909 = vmatpush.msra.mxu0 0.0
      %1910 = vmatpush.msra.mxu0 0.0
      %1911 = vmatpush.msra.mxu0 0.0
      %1912 = vmatpush.msra.mxu0 0.0
      %1913 = vmatpush.msra.mxu0 0.0
      %1914 = vmatpush.msra.mxu0 0.0
      %1915 = vmatpush.msra.mxu0 0.0
      %1916 = vmatpush.msra.mxu0 0.0
      %1917 = vmatpush.msra.mxu0 %v1836
      %1918 = vmatmul.f32.gmra.mxu0 %v1108
      %v1919 = vpop.f32.mrf.mxu0
      %v1920 = vadd.f32 0.0, %v1919
      %1921 = vmatmul.f32.gmra.mxu0 %v1111
      %v1922 = vpop.f32.mrf.mxu0
      %v1923 = vadd.f32 0.0, %v1922
      %1924 = vmatmul.f32.gmra.mxu0 %v1114
      %v1925 = vpop.f32.mrf.mxu0
      %v1926 = vadd.f32 0.0, %v1925
      %1927 = vmatmul.f32.gmra.mxu0 %v1117
      %v1928 = vpop.f32.mrf.mxu0
      %v1929 = vadd.f32 0.0, %v1928
      %1930 = vmatmul.f32.gmra.mxu0 %v1120
      %v1931 = vpop.f32.mrf.mxu0
      %v1932 = vadd.f32 0.0, %v1931
      %1933 = vmatmul.f32.gmra.mxu0 %v1123
      %v1934 = vpop.f32.mrf.mxu0
      %v1935 = vadd.f32 0.0, %v1934
      %1936 = vmatmul.f32.gmra.mxu0 %v1126
      %v1937 = vpop.f32.mrf.mxu0
      %v1938 = vadd.f32 0.0, %v1937
      %1939 = vmatmul.f32.gmra.mxu0 %v1129
      %v1940 = vpop.f32.mrf.mxu0
      %v1941 = vadd.f32 0.0, %v1940
      %1942 = vmatmul.f32.gmra.mxu0 %v1132
      %v1943 = vpop.f32.mrf.mxu0
      %v1944 = vadd.f32 0.0, %v1943
      %1945 = vmatmul.f32.gmra.mxu0 %v1135
      %v1946 = vpop.f32.mrf.mxu0
      %v1947 = vadd.f32 0.0, %v1946
      %1948 = vmatmul.f32.gmra.mxu0 %v1138
      %v1949 = vpop.f32.mrf.mxu0
      %v1950 = vadd.f32 0.0, %v1949
      %1951 = vmatmul.f32.gmra.mxu0 %v1141
      %v1952 = vpop.f32.mrf.mxu0
      %v1953 = vadd.f32 0.0, %v1952
      %1954 = vmatmul.f32.gmra.mxu0 %v1144
      %v1955 = vpop.f32.mrf.mxu0
      %v1956 = vadd.f32 0.0, %v1955
      %1957 = vmatmul.f32.gmra.mxu0 %v1147
      %v1958 = vpop.f32.mrf.mxu0
      %v1959 = vadd.f32 0.0, %v1958
      %1960 = vmatmul.f32.gmra.mxu0 %v1150
      %v1961 = vpop.f32.mrf.mxu0
      %v1962 = vadd.f32 0.0, %v1961
      %1963 = vmatmul.f32.gmra.mxu0 %v1153
      %v1964 = vpop.f32.mrf.mxu0
      %v1965 = vadd.f32 0.0, %v1964
      %1966 = vdwg.mxu0
      %v1967 = vmul.f32 %v1706, %v1855
      %v1968 = vmul.f32 %v1707, %v1858
      %v1969 = vmul.f32 %v1708, %v1861
      %v1970 = vmul.f32 %v1709, %v1864
      %v1971 = vmul.f32 %v1710, %v1867
      %v1972 = vmul.f32 %v1711, %v1870
      %v1973 = vmul.f32 %v1712, %v1873
      %v1974 = vmul.f32 %v1713, %v1876
      %v1975 = vmul.f32 %v1714, %v1879
      %v1976 = vmul.f32 %v1715, %v1882
      %v1977 = vmul.f32 %v1716, %v1885
      %v1978 = vmul.f32 %v1717, %v1888
      %v1979 = vmul.f32 %v1718, %v1891
      %v1980 = vmul.f32 %v1719, %v1894
      %v1981 = vmul.f32 %v1720, %v1897
      %v1982 = vmul.f32 %v1721, %v1900
      %v1983 = vadd.f32 %v1967, %v1920
      %v1984 = vadd.f32 %v1968, %v1923
      %v1985 = vadd.f32 %v1969, %v1926
      %v1986 = vadd.f32 %v1970, %v1929
      %v1987 = vadd.f32 %v1971, %v1932
      %v1988 = vadd.f32 %v1972, %v1935
      %v1989 = vadd.f32 %v1973, %v1938
      %v1990 = vadd.f32 %v1974, %v1941
      %v1991 = vadd.f32 %v1975, %v1944
      %v1992 = vadd.f32 %v1976, %v1947
      %v1993 = vadd.f32 %v1977, %v1950
      %v1994 = vadd.f32 %v1978, %v1953
      %v1995 = vadd.f32 %v1979, %v1956
      %v1996 = vadd.f32 %v1980, %v1959
      %v1997 = vadd.f32 %v1981, %v1962
      %v1998 = vadd.f32 %v1982, %v1965
      %1999 = vmatpush.msra.mxu0 %v715
      %2000 = vmatpush.msra.mxu0 %v712
      %2001 = vmatpush.msra.mxu0 %v709
      %2002 = vmatpush.msra.mxu0 %v706
      %2003 = vmatpush.msra.mxu0 %v703
      %2004 = vmatpush.msra.mxu0 %v700
      %2005 = vmatpush.msra.mxu0 %v697
      %2006 = vmatpush.msra.mxu0 %v694
      %2007 = vmatpush.msra.mxu0 %v691
      %2008 = vmatpush.msra.mxu0 %v688
      %2009 = vmatpush.msra.mxu0 %v685
      %2010 = vmatpush.msra.mxu0 %v682
      %2011 = vmatpush.msra.mxu0 %v679
      %2012 = vmatpush.msra.mxu0 %v676
      %2013 = vmatpush.msra.mxu0 %v673
      %2014 = vmatpush.msra.mxu0 %v670
      %2015 = vmatmul.f32.gmra.mxu0 %v358
      %v2016 = vpop.f32.mrf.mxu0
      %v2017 = vadd.f32 0.0, %v2016
      %2018 = vdwg.mxu0
      %v2019 = vmul.f32 %v670, %v670
      %v2020 = vmul.f32 %v673, %v673
      %v2021 = vmul.f32 %v676, %v676
      %v2022 = vmul.f32 %v679, %v679
      %v2023 = vmul.f32 %v682, %v682
      %v2024 = vmul.f32 %v685, %v685
      %v2025 = vmul.f32 %v688, %v688
      %v2026 = vmul.f32 %v691, %v691
      %v2027 = vmul.f32 %v694, %v694
      %v2028 = vmul.f32 %v697, %v697
      %v2029 = vmul.f32 %v700, %v700
      %v2030 = vmul.f32 %v703, %v703
      %v2031 = vmul.f32 %v706, %v706
      %v2032 = vmul.f32 %v709, %v709
      %v2033 = vmul.f32 %v712, %v712
      %v2034 = vmul.f32 %v715, %v715
      %2035 = vmatpush.msra.mxu0 %v2034
      %2036 = vmatpush.msra.mxu0 %v2033
      %2037 = vmatpush.msra.mxu0 %v2032
      %2038 = vmatpush.msra.mxu0 %v2031
      %2039 = vmatpush.msra.mxu0 %v2030
      %2040 = vmatpush.msra.mxu0 %v2029
      %2041 = vmatpush.msra.mxu0 %v2028
      %2042 = vmatpush.msra.mxu0 %v2027
      %2043 = vmatpush.msra.mxu0 %v2026
      %2044 = vmatpush.msra.mxu0 %v2025
      %2045 = vmatpush.msra.mxu0 %v2024
      %2046 = vmatpush.msra.mxu0 %v2023
      %2047 = vmatpush.msra.mxu0 %v2022
      %2048 = vmatpush.msra.mxu0 %v2021
      %2049 = vmatpush.msra.mxu0 %v2020
      %2050 = vmatpush.msra.mxu0 %v2019
      %2051 = vmatmul.f32.gmra.mxu0 %v358
      %v2052 = vpop.f32.mrf.mxu0
      %v2053 = vadd.f32 0.0, %v2052
      %2054 = vdwg.mxu0
      %2055 = vmatpush.msra.mxu0 %v390
      %2056 = vmatpush.msra.mxu0 %v389
      %2057 = vmatpush.msra.mxu0 %v388
      %2058 = vmatpush.msra.mxu0 %v387
      %2059 = vmatpush.msra.mxu0 %v386
      %2060 = vmatpush.msra.mxu0 %v385
      %2061 = vmatpush.msra.mxu0 %v384
      %2062 = vmatpush.msra.mxu0 %v383
      %2063 = vmatpush.msra.mxu0 %v382
      %2064 = vmatpush.msra.mxu0 %v381
      %2065 = vmatpush.msra.mxu0 %v380
      %2066 = vmatpush.msra.mxu0 %v379
      %2067 = vmatpush.msra.mxu0 %v378
      %2068 = vmatpush.msra.mxu0 %v377
      %2069 = vmatpush.msra.mxu0 %v376
      %2070 = vmatpush.msra.mxu0 %v375
      %2071 = vmatmul.f32.gmra.mxu0 %v2017
      %v2072 = vpop.f32.mrf.mxu0
      %v2073 = vadd.f32 0.0, %v2072
      %2074 = vdwg.mxu0
      %2075 = vmatpush.msra.mxu0 %v390
      %2076 = vmatpush.msra.mxu0 %v389
      %2077 = vmatpush.msra.mxu0 %v388
      %2078 = vmatpush.msra.mxu0 %v387
      %2079 = vmatpush.msra.mxu0 %v386
      %2080 = vmatpush.msra.mxu0 %v385
      %2081 = vmatpush.msra.mxu0 %v384
      %2082 = vmatpush.msra.mxu0 %v383
      %2083 = vmatpush.msra.mxu0 %v382
      %2084 = vmatpush.msra.mxu0 %v381
      %2085 = vmatpush.msra.mxu0 %v380
      %2086 = vmatpush.msra.mxu0 %v379
      %2087 = vmatpush.msra.mxu0 %v378
      %2088 = vmatpush.msra.mxu0 %v377
      %2089 = vmatpush.msra.mxu0 %v376
      %2090 = vmatpush.msra.mxu0 %v375
      %2091 = vmatmul.f32.gmra.mxu0 %v2053
      %v2092 = vpop.f32.mrf.mxu0
      %v2093 = vadd.f32 0.0, %v2092
      %2094 = vdwg.mxu0
      %v2095 = vmul.f32 %v2073, %v2073
      %v2096 = vsub.f32 %v2093, %v2095
      %v2097 = vmax.f32 %v2096, 0.0
      %v2098 = vadd.f32 %v2097, 1e-05
      %v2099 = vrsqrt.pop %v2098
      %v2100 = vmul.f32 %v2099, %v2098
      %v2101 = vmul.f32 %v2100, %v2099
      %v2102 = vmul.f32 0.5, %v2101
      %v2103 = vsub.f32 1.5, %v2102
      %v2104 = vmul.f32 %v2099, %v2103
      %vm2105 = vweird.f32 %v2098
      %vm2106 = vweird.f32 %v2099
      %vm2107 = vmor %vm2105, %vm2106
      %v2108 = vsel %vm2107, %v2099, %v2104
      %v2109 = vperm.slane %v391, 4
      %v2110 = vmul.f32 %v2108, %v2109
      %v2111 = vmul.f32 %v2073, %v2110
      %v2112 = vperm.slane %v391, 5
      %v2113 = vsub.f32 %v2112, %v2111
      %2114 = vmatpush.msra.mxu0 0.0
      %2115 = vmatpush.msra.mxu0 0.0
      %2116 = vmatpush.msra.mxu0 0.0
      %2117 = vmatpush.msra.mxu0 0.0
      %2118 = vmatpush.msra.mxu0 0.0
      %2119 = vmatpush.msra.mxu0 0.0
      %2120 = vmatpush.msra.mxu0 0.0
      %2121 = vmatpush.msra.mxu0 0.0
      %2122 = vmatpush.msra.mxu0 0.0
      %2123 = vmatpush.msra.mxu0 0.0
      %2124 = vmatpush.msra.mxu0 0.0
      %2125 = vmatpush.msra.mxu0 0.0
      %2126 = vmatpush.msra.mxu0 0.0
      %2127 = vmatpush.msra.mxu0 0.0
      %2128 = vmatpush.msra.mxu0 0.0
      %2129 = vmatpush.msra.mxu0 %v2110
      %2130 = vmatmul.f32.gmra.mxu0 %v1108
      %v2131 = vpop.f32.mrf.mxu0
      %v2132 = vadd.f32 0.0, %v2131
      %2133 = vmatmul.f32.gmra.mxu0 %v1111
      %v2134 = vpop.f32.mrf.mxu0
      %v2135 = vadd.f32 0.0, %v2134
      %2136 = vmatmul.f32.gmra.mxu0 %v1114
      %v2137 = vpop.f32.mrf.mxu0
      %v2138 = vadd.f32 0.0, %v2137
      %2139 = vmatmul.f32.gmra.mxu0 %v1117
      %v2140 = vpop.f32.mrf.mxu0
      %v2141 = vadd.f32 0.0, %v2140
      %2142 = vmatmul.f32.gmra.mxu0 %v1120
      %v2143 = vpop.f32.mrf.mxu0
      %v2144 = vadd.f32 0.0, %v2143
      %2145 = vmatmul.f32.gmra.mxu0 %v1123
      %v2146 = vpop.f32.mrf.mxu0
      %v2147 = vadd.f32 0.0, %v2146
      %2148 = vmatmul.f32.gmra.mxu0 %v1126
      %v2149 = vpop.f32.mrf.mxu0
      %v2150 = vadd.f32 0.0, %v2149
      %2151 = vmatmul.f32.gmra.mxu0 %v1129
      %v2152 = vpop.f32.mrf.mxu0
      %v2153 = vadd.f32 0.0, %v2152
      %2154 = vmatmul.f32.gmra.mxu0 %v1132
      %v2155 = vpop.f32.mrf.mxu0
      %v2156 = vadd.f32 0.0, %v2155
      %2157 = vmatmul.f32.gmra.mxu0 %v1135
      %v2158 = vpop.f32.mrf.mxu0
      %v2159 = vadd.f32 0.0, %v2158
      %2160 = vmatmul.f32.gmra.mxu0 %v1138
      %v2161 = vpop.f32.mrf.mxu0
      %v2162 = vadd.f32 0.0, %v2161
      %2163 = vmatmul.f32.gmra.mxu0 %v1141
      %v2164 = vpop.f32.mrf.mxu0
      %v2165 = vadd.f32 0.0, %v2164
      %2166 = vmatmul.f32.gmra.mxu0 %v1144
      %v2167 = vpop.f32.mrf.mxu0
      %v2168 = vadd.f32 0.0, %v2167
      %2169 = vmatmul.f32.gmra.mxu0 %v1147
      %v2170 = vpop.f32.mrf.mxu0
      %v2171 = vadd.f32 0.0, %v2170
      %2172 = vmatmul.f32.gmra.mxu0 %v1150
      %v2173 = vpop.f32.mrf.mxu0
      %v2174 = vadd.f32 0.0, %v2173
      %2175 = vmatmul.f32.gmra.mxu0 %v1153
      %v2176 = vpop.f32.mrf.mxu0
      %v2177 = vadd.f32 0.0, %v2176
      %2178 = vdwg.mxu0
      %2179 = vmatpush.msra.mxu0 0.0
      %2180 = vmatpush.msra.mxu0 0.0
      %2181 = vmatpush.msra.mxu0 0.0
      %2182 = vmatpush.msra.mxu0 0.0
      %2183 = vmatpush.msra.mxu0 0.0
      %2184 = vmatpush.msra.mxu0 0.0
      %2185 = vmatpush.msra.mxu0 0.0
      %2186 = vmatpush.msra.mxu0 0.0
      %2187 = vmatpush.msra.mxu0 0.0
      %2188 = vmatpush.msra.mxu0 0.0
      %2189 = vmatpush.msra.mxu0 0.0
      %2190 = vmatpush.msra.mxu0 0.0
      %2191 = vmatpush.msra.mxu0 0.0
      %2192 = vmatpush.msra.mxu0 0.0
      %2193 = vmatpush.msra.mxu0 0.0
      %2194 = vmatpush.msra.mxu0 %v2113
      %2195 = vmatmul.f32.gmra.mxu0 %v1108
      %v2196 = vpop.f32.mrf.mxu0
      %v2197 = vadd.f32 0.0, %v2196
      %2198 = vmatmul.f32.gmra.mxu0 %v1111
      %v2199 = vpop.f32.mrf.mxu0
      %v2200 = vadd.f32 0.0, %v2199
      %2201 = vmatmul.f32.gmra.mxu0 %v1114
      %v2202 = vpop.f32.mrf.mxu0
      %v2203 = vadd.f32 0.0, %v2202
      %2204 = vmatmul.f32.gmra.mxu0 %v1117
      %v2205 = vpop.f32.mrf.mxu0
      %v2206 = vadd.f32 0.0, %v2205
      %2207 = vmatmul.f32.gmra.mxu0 %v1120
      %v2208 = vpop.f32.mrf.mxu0
      %v2209 = vadd.f32 0.0, %v2208
      %2210 = vmatmul.f32.gmra.mxu0 %v1123
      %v2211 = vpop.f32.mrf.mxu0
      %v2212 = vadd.f32 0.0, %v2211
      %2213 = vmatmul.f32.gmra.mxu0 %v1126
      %v2214 = vpop.f32.mrf.mxu0
      %v2215 = vadd.f32 0.0, %v2214
      %2216 = vmatmul.f32.gmra.mxu0 %v1129
      %v2217 = vpop.f32.mrf.mxu0
      %v2218 = vadd.f32 0.0, %v2217
      %2219 = vmatmul.f32.gmra.mxu0 %v1132
      %v2220 = vpop.f32.mrf.mxu0
      %v2221 = vadd.f32 0.0, %v2220
      %2222 = vmatmul.f32.gmra.mxu0 %v1135
      %v2223 = vpop.f32.mrf.mxu0
      %v2224 = vadd.f32 0.0, %v2223
      %2225 = vmatmul.f32.gmra.mxu0 %v1138
      %v2226 = vpop.f32.mrf.mxu0
      %v2227 = vadd.f32 0.0, %v2226
      %2228 = vmatmul.f32.gmra.mxu0 %v1141
      %v2229 = vpop.f32.mrf.mxu0
      %v2230 = vadd.f32 0.0, %v2229
      %2231 = vmatmul.f32.gmra.mxu0 %v1144
      %v2232 = vpop.f32.mrf.mxu0
      %v2233 = vadd.f32 0.0, %v2232
      %2234 = vmatmul.f32.gmra.mxu0 %v1147
      %v2235 = vpop.f32.mrf.mxu0
      %v2236 = vadd.f32 0.0, %v2235
      %2237 = vmatmul.f32.gmra.mxu0 %v1150
      %v2238 = vpop.f32.mrf.mxu0
      %v2239 = vadd.f32 0.0, %v2238
      %2240 = vmatmul.f32.gmra.mxu0 %v1153
      %v2241 = vpop.f32.mrf.mxu0
      %v2242 = vadd.f32 0.0, %v2241
      %2243 = vdwg.mxu0
      %v2244 = vmul.f32 %v670, %v2132
      %v2245 = vmul.f32 %v673, %v2135
      %v2246 = vmul.f32 %v676, %v2138
      %v2247 = vmul.f32 %v679, %v2141
      %v2248 = vmul.f32 %v682, %v2144
      %v2249 = vmul.f32 %v685, %v2147
      %v2250 = vmul.f32 %v688, %v2150
      %v2251 = vmul.f32 %v691, %v2153
      %v2252 = vmul.f32 %v694, %v2156
      %v2253 = vmul.f32 %v697, %v2159
      %v2254 = vmul.f32 %v700, %v2162
      %v2255 = vmul.f32 %v703, %v2165
      %v2256 = vmul.f32 %v706, %v2168
      %v2257 = vmul.f32 %v709, %v2171
      %v2258 = vmul.f32 %v712, %v2174
      %v2259 = vmul.f32 %v715, %v2177
      %v2260 = vadd.f32 %v2244, %v2197
      %v2261 = vadd.f32 %v2245, %v2200
      %v2262 = vadd.f32 %v2246, %v2203
      %v2263 = vadd.f32 %v2247, %v2206
      %v2264 = vadd.f32 %v2248, %v2209
      %v2265 = vadd.f32 %v2249, %v2212
      %v2266 = vadd.f32 %v2250, %v2215
      %v2267 = vadd.f32 %v2251, %v2218
      %v2268 = vadd.f32 %v2252, %v2221
      %v2269 = vadd.f32 %v2253, %v2224
      %v2270 = vadd.f32 %v2254, %v2227
      %v2271 = vadd.f32 %v2255, %v2230
      %v2272 = vadd.f32 %v2256, %v2233
      %v2273 = vadd.f32 %v2257, %v2236
      %v2274 = vadd.f32 %v2258, %v2239
      %v2275 = vadd.f32 %v2259, %v2242
      %v2276 = vadd.f32 %v1983, %v2260
      %v2277 = vadd.f32 %v1984, %v2261
      %v2278 = vadd.f32 %v1985, %v2262
      %v2279 = vadd.f32 %v1986, %v2263
      %v2280 = vadd.f32 %v1987, %v2264
      %v2281 = vadd.f32 %v1988, %v2265
      %v2282 = vadd.f32 %v1989, %v2266
      %v2283 = vadd.f32 %v1990, %v2267
      %v2284 = vadd.f32 %v1991, %v2268
      %v2285 = vadd.f32 %v1992, %v2269
      %v2286 = vadd.f32 %v1993, %v2270
      %v2287 = vadd.f32 %v1994, %v2271
      %v2288 = vadd.f32 %v1995, %v2272
      %v2289 = vadd.f32 %v1996, %v2273
      %v2290 = vadd.f32 %v1997, %v2274
      %v2291 = vadd.f32 %v1998, %v2275
      %v2292 = vmax.f32 %v2276, 0.0
      %v2293 = vmax.f32 %v2277, 0.0
      %v2294 = vmax.f32 %v2278, 0.0
      %v2295 = vmax.f32 %v2279, 0.0
      %v2296 = vmax.f32 %v2280, 0.0
      %v2297 = vmax.f32 %v2281, 0.0
      %v2298 = vmax.f32 %v2282, 0.0
      %v2299 = vmax.f32 %v2283, 0.0
      %v2300 = vmax.f32 %v2284, 0.0
      %v2301 = vmax.f32 %v2285, 0.0
      %v2302 = vmax.f32 %v2286, 0.0
      %v2303 = vmax.f32 %v2287, 0.0
      %v2304 = vmax.f32 %v2288, 0.0
      %v2305 = vmax.f32 %v2289, 0.0
      %v2306 = vmax.f32 %v2290, 0.0
      %v2307 = vmax.f32 %v2291, 0.0
      %2308 = vst [vmem:[%s307] sm:$0xff] %v2292
      %2309 = vst [vmem:[%s307 + $0x8] sm:$0xff] %v2293
      %2310 = vst [vmem:[%s307 + $0x10] sm:$0xff] %v2294
      %2311 = vst [vmem:[%s307 + $0x18] sm:$0xff] %v2295
      %2312 = vst [vmem:[%s307 + $0x20] sm:$0xff] %v2296
      %2313 = vst [vmem:[%s307 + $0x28] sm:$0xff] %v2297
      %2314 = vst [vmem:[%s307 + $0x30] sm:$0xff] %v2298
      %2315 = vst [vmem:[%s307 + $0x38] sm:$0xff] %v2299
      %2316 = vst [vmem:[%s307 + $0x40] sm:$0xff] %v2300
      %2317 = vst [vmem:[%s307 + $0x48] sm:$0xff] %v2301
      %2318 = vst [vmem:[%s307 + $0x50] sm:$0xff] %v2302
      %2319 = vst [vmem:[%s307 + $0x58] sm:$0xff] %v2303
      %2320 = vst [vmem:[%s307 + $0x60] sm:$0xff] %v2304
      %2321 = vst [vmem:[%s307 + $0x68] sm:$0xff] %v2305
      %2322 = vst [vmem:[%s307 + $0x70] sm:$0xff] %v2306
      %2323 = vst [vmem:[%s307 + $0x78] sm:$0xff] %v2307
      %s2324 = smul.u32 16, %s19
      %p2325 = scmp.lt.s32.totalorder %s2324, 31
      %s2326 = scalar_select %p2325, %s2324, 31
      %s2327 = smul.addr %s2326, 8
      %s2328 = scalar_lea.vmem %s8, %s2327
      // Predicated region
      $region53: #{basic_block_forward.1} parent=51 // pred_check
        %p2329 = pneg %p210
      $region54: #{basic_block_forward.1} parent=51 // pred_check_branch
        %2331 = sbr.rel (%p2329) target = $region56
      $region55: #{basic_block_forward.1} parent=51 // pred_region
        %s2332 = smul.u32 16, %s19
      $region56: #{basic_block_forward.1} parent=51 // pred_fallthru
        _
    $region52: #{basic_block_forward.1} parent=5 // pred_fallthru
      _
    %p2333 = scmp.le.s32.totalorder 2, %s14
    // Predicated region
    $region57: #{basic_block_forward.1} parent=5 // pred_check
      %p2334 = pneg %p2333
    $region58: #{basic_block_forward.1} parent=5 // pred_check_branch
      %2336 = sbr.rel (%p2334) target = $region60
    $region59: #{basic_block_forward.1} parent=5 // pred_region
      %s2337 = ssub.s32 %s14, 2
      // Predicated region
      $region61: #{basic_block_forward.1} parent=59 // pred_check
        %p2338 = pneg %p216
      $region62: #{basic_block_forward.1} parent=59 // pred_check_branch
        %2340 = sbr.rel (%p2338) target = $region64
      $region63: #{basic_block_forward.1} parent=59 // pred_region
        %s2341 = smul.u32 16, %s20
        %p2342 = scmp.lt.s32.totalorder %s2341, 31
        %s2343 = scalar_select %p2342, %s2341, 31
        %s2344 = smul.addr %s2343, 8
        %s2345 = scalar_lea.vmem %s8, %s2344
      $region64: #{basic_block_forward.1} parent=59 // pred_fallthru
        _
    $region60: #{basic_block_forward.1} parent=5 // pred_fallthru
      _
  $region6: #{basic_block_forward.1} parent=0 // loop_footer
    %s18 = sadd.s32 1, %s14
  $region7: #{basic_block_forward.1} parent=0 // loop_footer_branch
    %13 = sbr.rel target = $region3
  $region8: #{basic_block_forward.1} parent=0 // loop_exit
    _

</llo_original>
